<compile_context>
chip_gen: v6e
topology: v6e:2x2x1
jax: 0.10.0
libtpu: 0.0.40
codegen_flags: <defaults>
</compile_context>

<pallas_src>
import jax
import jax.numpy as jnp
from jax.experimental import pallas as pl
from jax.experimental.pallas import tpu as pltpu

EPS = 1e-5

# Set to jnp.bfloat16 on v6e/v7x for 2-4x MXU throughput (f32 accumulation is
# kept via preferred_element_type). Default f32 to match the PyTorch f32
# forward closely; if you switch to bf16, loosen the test tolerance (~3e-2).
# v5e note: the BN/ReLU FMA and stats stay f32 regardless (no bf16 VPU there).
MATMUL_DTYPE = jnp.float32


# ----------------------------- kernels --------------------------------------


def _conv3x3_banded(a, w_ref):
    """3x3 'SAME' conv on a lane-dense (H, W*Cin) slab.

    w_ref holds 3 banded matrices (one per kernel row dy) of shape
    (W*Cin, W*Cout). Width padding lives in the clipped band; height padding is
    emulated with two sublane rolls + border masks. Returns (H, W*Cout) f32.
    """
    h = a.shape[0]
    am = a.astype(w_ref.dtype)
    z0 = jnp.dot(am, w_ref[0], preferred_element_type=jnp.float32)  # dy = 0 (row above)
    z1 = jnp.dot(am, w_ref[1], preferred_element_type=jnp.float32)  # dy = 1 (same row)
    z2 = jnp.dot(am, w_ref[2], preferred_element_type=jnp.float32)  # dy = 2 (row below)
    row = jax.lax.broadcasted_iota(jnp.int32, z1.shape, 0)
    y = z1
    # y[r] += z0[r-1]  (zero at r == 0): sublane roll down by 1 + mask (XLU + VPU).
    y = y + jnp.where(row > 0, pltpu.roll(z0, shift=1, axis=0), 0.0)
    # y[r] += z2[r+1]  (zero at r == H-1): sublane roll up by 1 (as +h-1) + mask.
    y = y + jnp.where(row < h - 1, pltpu.roll(z2, shift=h - 1, axis=0), 0.0)
    return y


def _conv1_kernel(x_ref, w_ref, y_ref, stat_ref):
    """conv1 + lane-dense per-image partial BN stats (column sums over rows)."""
    y = _conv3x3_banded(x_ref[...], w_ref)
    y_ref[...] = y                                        # already (H, W*Cout)
    stat_ref[0:1, :] = jnp.sum(y, axis=0, keepdims=True)  # (1, W*Cout), lane-dense
    stat_ref[1:2, :] = jnp.sum(y * y, axis=0, keepdims=True)


def _bn1_relu_conv2_kernel(y1_ref, s_ref, t_ref, w_ref, y2_ref, stat_ref):
    """Folded BN1 + ReLU (one lane-dense FMA + max) -> conv2 -> partial stats."""
    a = jnp.maximum(y1_ref[...] * s_ref[...] + t_ref[...], 0.0)
    y = _conv3x3_banded(a, w_ref)
    y2_ref[...] = y
    stat_ref[0:1, :] = jnp.sum(y, axis=0, keepdims=True)
    stat_ref[1:2, :] = jnp.sum(y * y, axis=0, keepdims=True)


# ----------------------------- glue / wrapper --------------------------------


def _band_weights(w, width, dtype):
    """(3, 3, Cin, Cout) -> (3, W*Cin, W*Cout) banded per-dy matrices.

    M_dy[wi*Cin+ci, wo*Cout+co] = w[dy, wi-wo+1, ci, co] for |wi - wo| <= 1,
    else 0 — the clipped band implements the width zero-padding of the conv.
    """
    mats = []
    for dy in range(3):
        m = jnp.zeros((width * w.shape[2], width * w.shape[3]), jnp.float32)
        for dx in range(3):
            m = m + jnp.kron(jnp.eye(width, k=1 - dx, dtype=jnp.float32), w[dy, dx])
        mats.append(m)
    return jnp.stack(mats, axis=0).astype(dtype)


def _fold_bn(stat, count, gamma, beta, width, cout):
    """Fold lane-dense partial stats into the per-channel BN affine y*s + t."""
    tot = jnp.sum(stat, axis=0).reshape(2, width, cout).sum(axis=1)   # (2, Cout)
    mu = tot[0] / count
    # Note: E[x^2]-mu^2 can cancel if the conv-output mean is large; bias-free
    # convs keep the mean near zero here, so f32 is comfortably accurate.
    var = jnp.maximum(tot[1] / count - mu * mu, 0.0)                  # biased var
    s = gamma.reshape(-1) * jax.lax.rsqrt(var + EPS)
    t = beta.reshape(-1) - mu * s
    return s, t


def _compiler_params(*block_bytes):
    """Per-call compiler params with a VMEM limit derived from the block sizes."""
    need = 2 * int(sum(block_bytes)) + (1 << 20)      # double-buffering + margin
    # v7x has 64 MiB VMEM (keep requests <= ~48 MiB there); v5e/v6e have 128 MiB.
    limit = int(min(max(need, 16 << 20), 96 << 20))
    return pltpu.CompilerParams(
        dimension_semantics=("parallel",),
        vmem_limit_bytes=limit,
    )


@jax.jit
def unet_block_nhwc(x_nhwc, params):
    """NHWC in -> NHWC out (keep the surrounding model NHWC to avoid transposes)."""
    (w1, _b1, g1, be1, w2, _b2, g2, be2) = params
    B, H, W, Cin = x_nhwc.shape
    Cout = w1.shape[-1]
    WCI = W * Cin
    WC = W * Cout
    n = B * H * W

    # Conv biases dropped: a per-channel bias followed by batch-stat BN is
    # exactly cancelled by the mean subtraction.
    x2d = x_nhwc.astype(jnp.float32).reshape(B, H, WCI)             # lane-dense slab
    w1b = _band_weights(w1.astype(jnp.float32), W, MATMUL_DTYPE)    # (3, WCI, WC)
    w2b = _band_weights(w2.astype(jnp.float32), W, MATMUL_DTYPE)    # (3, WC,  WC)
    wbytes = jnp.dtype(MATMUL_DTYPE).itemsize

    # ---- kernel A: conv1 + per-image partial stats --------------------------
    y1, stat1 = pl.pallas_call(
        _conv1_kernel,
        grid=(B,),
        in_specs=[
            pl.BlockSpec((None, H, WCI), lambda b: (b, 0, 0)),
            pl.BlockSpec((3, WCI, WC), lambda b: (0, 0, 0)),
        ],
        out_specs=(
            pl.BlockSpec((None, H, WC), lambda b: (b, 0, 0)),
            pl.BlockSpec((None, 2, WC), lambda b: (b, 0, 0)),
        ),
        out_shape=(
            jax.ShapeDtypeStruct((B, H, WC), jnp.float32),
            jax.ShapeDtypeStruct((B, 2, WC), jnp.float32),
        ),
        compiler_params=_compiler_params(
            H * WCI * 4, 3 * WCI * WC * wbytes, H * WC * 4, 2 * WC * 4),
    )(x2d, w1b)

    s1, t1 = _fold_bn(stat1, n, g1, be1, W, Cout)
    s1l = jnp.tile(s1, W).reshape(1, WC)     # lane layout matches (H, W*Cout)
    t1l = jnp.tile(t1, W).reshape(1, WC)

    # ---- kernel B: folded BN1 + ReLU + conv2 + per-image partial stats -------
    y2, stat2 = pl.pallas_call(
        _bn1_relu_conv2_kernel,
        grid=(B,),
        in_specs=[
            pl.BlockSpec((None, H, WC), lambda b: (b, 0, 0)),
            pl.BlockSpec((1, WC), lambda b: (0, 0)),
            pl.BlockSpec((1, WC), lambda b: (0, 0)),
            pl.BlockSpec((3, WC, WC), lambda b: (0, 0, 0)),
        ],
        out_specs=(
            pl.BlockSpec((None, H, WC), lambda b: (b, 0, 0)),
            pl.BlockSpec((None, 2, WC), lambda b: (b, 0, 0)),
        ),
        out_shape=(
            jax.ShapeDtypeStruct((B, H, WC), jnp.float32),
            jax.ShapeDtypeStruct((B, 2, WC), jnp.float32),
        ),
        compiler_params=_compiler_params(
            H * WC * 4, 2 * WC * 4, 3 * WC * WC * wbytes, H * WC * 4, 2 * WC * 4),
    )(y1, s1l, t1l, w2b)

    s2, t2 = _fold_bn(stat2, n, g2, be2, W, Cout)

    # ---- BN2 + ReLU in the wrapper: a single HBM-roofline FMA+max that XLA
    # fuses with the final reshape/transpose (one fewer pallas_call). ----------
    y2r = y2.reshape(B, H, W, Cout)
    out = jnp.maximum(
        y2r * s2.reshape(1, 1, 1, Cout) + t2.reshape(1, 1, 1, Cout), 0.0)
    return out


def unet_block(x_nchw, params):
    """PyTorch-layout wrapper: (B, Cin, H, W) -> (B, Cout, H, W)."""
    x_nhwc = jnp.transpose(x_nchw, (0, 2, 3, 1))
    y = unet_block_nhwc(x_nhwc, params)
    return jnp.transpose(y, (0, 3, 1, 2))


# ----------------------------- reference & test ------------------------------


def reference_unet_block(x_nchw, params):
    """Pure-JAX reference (NHWC conv + bias + batch-stat BN + ReLU)."""
    (w1, b1, g1, be1, w2, b2, g2, be2) = params
    x = jnp.transpose(x_nchw, (0, 2, 3, 1))

    def conv(x, w, b):
        y = jax.lax.conv_general_dilated(
            x, w, window_strides=(1, 1), padding="SAME",
            dimension_numbers=("NHWC", "HWIO", "NHWC"))
        return y + b.reshape(1, 1, 1, -1)

    def bn_relu(y, g, be):
        mu = jnp.mean(y, axis=(0, 1, 2), keepdims=True)
        var = jnp.mean((y - mu) ** 2, axis=(0, 1, 2), keepdims=True)
        yn = (y - mu) * jax.lax.rsqrt(var + EPS)
        yn = yn * g.reshape(1, 1, 1, -1) + be.reshape(1, 1, 1, -1)
        return jnp.maximum(yn, 0.0)

    y = bn_relu(conv(x, w1, b1), g1, be1)
    y = bn_relu(conv(y, w2, b2), g2, be2)
    return jnp.transpose(y, (0, 3, 1, 2))


def init_params(key, cin, cout):
    k1, k2, k3, k4 = jax.random.split(key, 4)
    w1 = jax.random.normal(k1, (3, 3, cin, cout), jnp.float32) * (2.0 / (9 * cin)) ** 0.5
    b1 = jax.random.normal(k2, (1, cout), jnp.float32) * 0.1
    w2 = jax.random.normal(k3, (3, 3, cout, cout), jnp.float32) * (2.0 / (9 * cout)) ** 0.5
    b2 = jax.random.normal(k4, (1, cout), jnp.float32) * 0.1
    g1 = jnp.ones((1, cout), jnp.float32)
    be1 = jnp.zeros((1, cout), jnp.float32)
    g2 = jnp.ones((1, cout), jnp.float32)
    be2 = jnp.zeros((1, cout), jnp.float32)
    return (w1, b1, g1, be1, w2, b2, g2, be2)


if __name__ == "__main__":
    key = jax.random.PRNGKey(0)
    kx, kp = jax.random.split(key)

    B, Cin, Cout, H, W = 2, 4, 8, 16, 16
    x = jax.random.normal(kx, (B, Cin, H, W), jnp.float32)
    params = init_params(kp, Cin, Cout)

    out = unet_block(x, params)
    out = jax.block_until_ready(out)

    ref = reference_unet_block(x, params)
    assert out.shape == (B, Cout, H, W)
    # f32 throughout; tolerance covers the exactly-cancelled conv-bias drop and
    # the E[x^2]-mu^2 variance formulation (observed diffs ~1e-6 at f32).
    assert jnp.allclose(out, ref, atol=1e-3, rtol=1e-3), (
        f"max abs err {jnp.max(jnp.abs(out - ref))}")

    print("KERNEL_OK")
</pallas_src>

<mosaic_0001>
module attributes {stable_mosaic.version = 11 : i64} {
  func.func @_conv1_kernel(%arg0: i32, %arg1: memref<1x16x64xf32, #tpu.memory_space<vmem>>, %arg2: memref<3x64x128xf32, #tpu.memory_space<vmem>>, %arg3: memref<1x16x128xf32, #tpu.memory_space<vmem>>, %arg4: memref<1x2x128xf32, #tpu.memory_space<vmem>>) attributes {dimension_semantics = [#tpu.dimension_semantics<parallel>], iteration_bounds = array<i64: 2>, scalar_prefetch = 0 : i64, scratch_operands = 0 : i64, tpu.core_type = #tpu.core_type<tc>, window_params = [{transform_indices = @transform_0, window_bounds = array<i64: 1, 16, 64>}, {pipeline_mode = #tpu.pipeline_mode<synchronous>, transform_indices = @transform_1, window_bounds = array<i64: 3, 64, 128>}, {transform_indices = @transform_2, window_bounds = array<i64: 1, 16, 128>}, {transform_indices = @transform_3, window_bounds = array<i64: 1, 2, 128>}]} {
    %c0 = arith.constant 0 : index
    %c0_0 = arith.constant 0 : index
    %c0_1 = arith.constant 0 : index
    %0 = vector.load %arg1[%c0, %c0_0, %c0_1] : memref<1x16x64xf32, #tpu.memory_space<vmem>>, vector<1x16x64xf32>
    %1 = vector.shape_cast %0 : vector<1x16x64xf32> to vector<16x64xf32>
    %c0_2 = arith.constant 0 : index
    %c0_3 = arith.constant 0 : index
    %c0_4 = arith.constant 0 : index
    %2 = vector.load %arg2[%c0_2, %c0_3, %c0_4] : memref<3x64x128xf32, #tpu.memory_space<vmem>>, vector<1x64x128xf32>
    %3 = vector.shape_cast %2 : vector<1x64x128xf32> to vector<64x128xf32>
    %cst = arith.constant dense<0.000000e+00> : vector<16x128xf32>
    %4 = tpu.matmul %1, %3, %cst {dimension_numbers = #tpu.dot_dimension_numbers<[1], [0], [0], [1], [0, 0, 1, 1], [], []>} : vector<16x64xf32>, vector<64x128xf32>, vector<16x128xf32> -> vector<16x128xf32>
    %c1 = arith.constant 1 : index
    %c0_5 = arith.constant 0 : index
    %c0_6 = arith.constant 0 : index
    %5 = vector.load %arg2[%c1, %c0_5, %c0_6] : memref<3x64x128xf32, #tpu.memory_space<vmem>>, vector<1x64x128xf32>
    %6 = vector.shape_cast %5 : vector<1x64x128xf32> to vector<64x128xf32>
    %cst_7 = arith.constant dense<0.000000e+00> : vector<16x128xf32>
    %7 = tpu.matmul %1, %6, %cst_7 {dimension_numbers = #tpu.dot_dimension_numbers<[1], [0], [0], [1], [0, 0, 1, 1], [], []>} : vector<16x64xf32>, vector<64x128xf32>, vector<16x128xf32> -> vector<16x128xf32>
    %c2 = arith.constant 2 : index
    %c0_8 = arith.constant 0 : index
    %c0_9 = arith.constant 0 : index
    %8 = vector.load %arg2[%c2, %c0_8, %c0_9] : memref<3x64x128xf32, #tpu.memory_space<vmem>>, vector<1x64x128xf32>
    %9 = vector.shape_cast %8 : vector<1x64x128xf32> to vector<64x128xf32>
    %cst_10 = arith.constant dense<0.000000e+00> : vector<16x128xf32>
    %10 = tpu.matmul %1, %9, %cst_10 {dimension_numbers = #tpu.dot_dimension_numbers<[1], [0], [0], [1], [0, 0, 1, 1], [], []>} : vector<16x64xf32>, vector<64x128xf32>, vector<16x128xf32> -> vector<16x128xf32>
    %11 = tpu.iota {dimensions = array<i32: 0>} : vector<16x128xi32>
    %c0_i32 = arith.constant 0 : i32
    %12 = vector.broadcast %c0_i32 : i32 to vector<16x128xi32>
    %13 = arith.cmpi sgt, %11, %12 : vector<16x128xi32>
    %c1_i32 = arith.constant 1 : i32
    %14 = tpu.dynamic_rotate %4 by %c1_i32 dim 0 : vector<16x128xf32>, i32 -> vector<16x128xf32>
    %cst_11 = arith.constant 0.000000e+00 : f32
    %15 = vector.broadcast %cst_11 : f32 to vector<16x128xf32>
    %16 = arith.select %13, %14, %15 : vector<16x128xi1>, vector<16x128xf32>
    %17 = arith.addf %7, %16 : vector<16x128xf32>
    %c15_i32 = arith.constant 15 : i32
    %18 = vector.broadcast %c15_i32 : i32 to vector<16x128xi32>
    %19 = arith.cmpi slt, %11, %18 : vector<16x128xi32>
    %c15_i32_12 = arith.constant 15 : i32
    %20 = tpu.dynamic_rotate %10 by %c15_i32_12 dim 0 : vector<16x128xf32>, i32 -> vector<16x128xf32>
    %cst_13 = arith.constant 0.000000e+00 : f32
    %21 = vector.broadcast %cst_13 : f32 to vector<16x128xf32>
    %22 = arith.select %19, %20, %21 : vector<16x128xi1>, vector<16x128xf32>
    %23 = arith.addf %17, %22 : vector<16x128xf32>
    %c0_14 = arith.constant 0 : index
    %c0_15 = arith.constant 0 : index
    %c0_16 = arith.constant 0 : index
    %24 = vector.load %arg3[%c0_14, %c0_15, %c0_16] : memref<1x16x128xf32, #tpu.memory_space<vmem>>, vector<1x16x128xf32>
    %25 = vector.shape_cast %24 : vector<1x16x128xf32> to vector<16x128xf32>
    %26 = vector.shape_cast %23 : vector<16x128xf32> to vector<1x16x128xf32>
    tpu.vector_store %arg3[%c0_14, %c0_15, %c0_16], %26 {strides = array<i32>} : memref<1x16x128xf32, #tpu.memory_space<vmem>>, vector<1x16x128xf32>,
    %cst_17 = arith.constant dense<0.000000e+00> : vector<128xf32>
    %27 = vector.multi_reduction <add>, %23, %cst_17 [0] : vector<16x128xf32> to vector<128xf32>
    %28 = vector.shape_cast %27 : vector<128xf32> to vector<1x128xf32>
    %c0_18 = arith.constant 0 : index
    %c0_19 = arith.constant 0 : index
    %c0_20 = arith.constant 0 : index
    %29 = vector.load %arg4[%c0_18, %c0_19, %c0_20] : memref<1x2x128xf32, #tpu.memory_space<vmem>>, vector<1x1x128xf32>
    %30 = vector.shape_cast %29 : vector<1x1x128xf32> to vector<1x128xf32>
    %31 = vector.shape_cast %28 : vector<1x128xf32> to vector<1x1x128xf32>
    tpu.vector_store %arg4[%c0_18, %c0_19, %c0_20], %31 {strides = array<i32>} : memref<1x2x128xf32, #tpu.memory_space<vmem>>, vector<1x1x128xf32>,
    %32 = arith.mulf %23, %23 : vector<16x128xf32>
    %cst_21 = arith.constant dense<0.000000e+00> : vector<128xf32>
    %33 = vector.multi_reduction <add>, %32, %cst_21 [0] : vector<16x128xf32> to vector<128xf32>
    %34 = vector.shape_cast %33 : vector<128xf32> to vector<1x128xf32>
    %c0_22 = arith.constant 0 : index
    %c1_23 = arith.constant 1 : index
    %c0_24 = arith.constant 0 : index
    %35 = vector.load %arg4[%c0_22, %c1_23, %c0_24] : memref<1x2x128xf32, #tpu.memory_space<vmem>>, vector<1x1x128xf32>
    %36 = vector.shape_cast %35 : vector<1x1x128xf32> to vector<1x128xf32>
    %37 = vector.shape_cast %34 : vector<1x128xf32> to vector<1x1x128xf32>
    tpu.vector_store %arg4[%c0_22, %c1_23, %c0_24], %37 {strides = array<i32>} : memref<1x2x128xf32, #tpu.memory_space<vmem>>, vector<1x1x128xf32>,
    return
  }
  func.func @transform_0(%arg0: i32) -> (i32, i32, i32) {
    %c0_i32 = arith.constant 0 : i32
    %c0_i32_0 = arith.constant 0 : i32
    %c0_i32_1 = arith.constant 0 : i32
    return %arg0, %c0_i32, %c0_i32_0 : i32, i32, i32
  }
  func.func @transform_1(%arg0: i32) -> (i32, i32, i32) {
    %c0_i32 = arith.constant 0 : i32
    %c0_i32_0 = arith.constant 0 : i32
    %c0_i32_1 = arith.constant 0 : i32
    %c0_i32_2 = arith.constant 0 : i32
    return %c0_i32, %c0_i32_0, %c0_i32_1 : i32, i32, i32
  }
  func.func @transform_2(%arg0: i32) -> (i32, i32, i32) {
    %c0_i32 = arith.constant 0 : i32
    %c0_i32_0 = arith.constant 0 : i32
    %c0_i32_1 = arith.constant 0 : i32
    return %arg0, %c0_i32, %c0_i32_0 : i32, i32, i32
  }
  func.func @transform_3(%arg0: i32) -> (i32, i32, i32) {
    %c0_i32 = arith.constant 0 : i32
    %c0_i32_0 = arith.constant 0 : i32
    %c0_i32_1 = arith.constant 0 : i32
    return %arg0, %c0_i32, %c0_i32_0 : i32, i32, i32
  }
}

module attributes {stable_mosaic.version = 11 : i64} {
  func.func @_bn1_relu_conv2_kernel(%arg0: i32, %arg1: memref<1x16x128xf32, #tpu.memory_space<vmem>>, %arg2: memref<1x128xf32, #tpu.memory_space<vmem>>, %arg3: memref<1x128xf32, #tpu.memory_space<vmem>>, %arg4: memref<3x128x128xf32, #tpu.memory_space<vmem>>, %arg5: memref<1x16x128xf32, #tpu.memory_space<vmem>>, %arg6: memref<1x2x128xf32, #tpu.memory_space<vmem>>) attributes {dimension_semantics = [#tpu.dimension_semantics<parallel>], iteration_bounds = array<i64: 2>, scalar_prefetch = 0 : i64, scratch_operands = 0 : i64, tpu.core_type = #tpu.core_type<tc>, window_params = [{transform_indices = @transform_0, window_bounds = array<i64: 1, 16, 128>}, {pipeline_mode = #tpu.pipeline_mode<synchronous>, transform_indices = @transform_1, window_bounds = array<i64: 1, 128>}, {pipeline_mode = #tpu.pipeline_mode<synchronous>, transform_indices = @transform_2, window_bounds = array<i64: 1, 128>}, {pipeline_mode = #tpu.pipeline_mode<synchronous>, transform_indices = @transform_3, window_bounds = array<i64: 3, 128, 128>}, {transform_indices = @transform_4, window_bounds = array<i64: 1, 16, 128>}, {transform_indices = @transform_5, window_bounds = array<i64: 1, 2, 128>}]} {
    %c0 = arith.constant 0 : index
    %c0_0 = arith.constant 0 : index
    %c0_1 = arith.constant 0 : index
    %0 = vector.load %arg1[%c0, %c0_0, %c0_1] : memref<1x16x128xf32, #tpu.memory_space<vmem>>, vector<1x16x128xf32>
    %1 = vector.shape_cast %0 : vector<1x16x128xf32> to vector<16x128xf32>
    %c0_2 = arith.constant 0 : index
    %c0_3 = arith.constant 0 : index
    %2 = vector.load %arg2[%c0_2, %c0_3] : memref<1x128xf32, #tpu.memory_space<vmem>>, vector<1x128xf32>
    %3 = vector.broadcast %2 : vector<1x128xf32> to vector<16x128xf32>
    %4 = arith.mulf %1, %3 : vector<16x128xf32>
    %c0_4 = arith.constant 0 : index
    %c0_5 = arith.constant 0 : index
    %5 = vector.load %arg3[%c0_4, %c0_5] : memref<1x128xf32, #tpu.memory_space<vmem>>, vector<1x128xf32>
    %6 = vector.broadcast %5 : vector<1x128xf32> to vector<16x128xf32>
    %7 = arith.addf %4, %6 : vector<16x128xf32>
    %cst = arith.constant 0.000000e+00 : f32
    %8 = vector.broadcast %cst : f32 to vector<16x128xf32>
    %9 = arith.maximumf %7, %8 : vector<16x128xf32>
    %c0_6 = arith.constant 0 : index
    %c0_7 = arith.constant 0 : index
    %c0_8 = arith.constant 0 : index
    %10 = vector.load %arg4[%c0_6, %c0_7, %c0_8] : memref<3x128x128xf32, #tpu.memory_space<vmem>>, vector<1x128x128xf32>
    %11 = vector.shape_cast %10 : vector<1x128x128xf32> to vector<128x128xf32>
    %cst_9 = arith.constant dense<0.000000e+00> : vector<16x128xf32>
    %12 = tpu.matmul %9, %11, %cst_9 {dimension_numbers = #tpu.dot_dimension_numbers<[1], [0], [0], [1], [0, 0, 1, 1], [], []>} : vector<16x128xf32>, vector<128x128xf32>, vector<16x128xf32> -> vector<16x128xf32>
    %c1 = arith.constant 1 : index
    %c0_10 = arith.constant 0 : index
    %c0_11 = arith.constant 0 : index
    %13 = vector.load %arg4[%c1, %c0_10, %c0_11] : memref<3x128x128xf32, #tpu.memory_space<vmem>>, vector<1x128x128xf32>
    %14 = vector.shape_cast %13 : vector<1x128x128xf32> to vector<128x128xf32>
    %cst_12 = arith.constant dense<0.000000e+00> : vector<16x128xf32>
    %15 = tpu.matmul %9, %14, %cst_12 {dimension_numbers = #tpu.dot_dimension_numbers<[1], [0], [0], [1], [0, 0, 1, 1], [], []>} : vector<16x128xf32>, vector<128x128xf32>, vector<16x128xf32> -> vector<16x128xf32>
    %c2 = arith.constant 2 : index
    %c0_13 = arith.constant 0 : index
    %c0_14 = arith.constant 0 : index
    %16 = vector.load %arg4[%c2, %c0_13, %c0_14] : memref<3x128x128xf32, #tpu.memory_space<vmem>>, vector<1x128x128xf32>
    %17 = vector.shape_cast %16 : vector<1x128x128xf32> to vector<128x128xf32>
    %cst_15 = arith.constant dense<0.000000e+00> : vector<16x128xf32>
    %18 = tpu.matmul %9, %17, %cst_15 {dimension_numbers = #tpu.dot_dimension_numbers<[1], [0], [0], [1], [0, 0, 1, 1], [], []>} : vector<16x128xf32>, vector<128x128xf32>, vector<16x128xf32> -> vector<16x128xf32>
    %19 = tpu.iota {dimensions = array<i32: 0>} : vector<16x128xi32>
    %c0_i32 = arith.constant 0 : i32
    %20 = vector.broadcast %c0_i32 : i32 to vector<16x128xi32>
    %21 = arith.cmpi sgt, %19, %20 : vector<16x128xi32>
    %c1_i32 = arith.constant 1 : i32
    %22 = tpu.dynamic_rotate %12 by %c1_i32 dim 0 : vector<16x128xf32>, i32 -> vector<16x128xf32>
    %cst_16 = arith.constant 0.000000e+00 : f32
    %23 = vector.broadcast %cst_16 : f32 to vector<16x128xf32>
    %24 = arith.select %21, %22, %23 : vector<16x128xi1>, vector<16x128xf32>
    %25 = arith.addf %15, %24 : vector<16x128xf32>
    %c15_i32 = arith.constant 15 : i32
    %26 = vector.broadcast %c15_i32 : i32 to vector<16x128xi32>
    %27 = arith.cmpi slt, %19, %26 : vector<16x128xi32>
    %c15_i32_17 = arith.constant 15 : i32
    %28 = tpu.dynamic_rotate %18 by %c15_i32_17 dim 0 : vector<16x128xf32>, i32 -> vector<16x128xf32>
    %cst_18 = arith.constant 0.000000e+00 : f32
    %29 = vector.broadcast %cst_18 : f32 to vector<16x128xf32>
    %30 = arith.select %27, %28, %29 : vector<16x128xi1>, vector<16x128xf32>
    %31 = arith.addf %25, %30 : vector<16x128xf32>
    %c0_19 = arith.constant 0 : index
    %c0_20 = arith.constant 0 : index
    %c0_21 = arith.constant 0 : index
    %32 = vector.load %arg5[%c0_19, %c0_20, %c0_21] : memref<1x16x128xf32, #tpu.memory_space<vmem>>, vector<1x16x128xf32>
    %33 = vector.shape_cast %32 : vector<1x16x128xf32> to vector<16x128xf32>
    %34 = vector.shape_cast %31 : vector<16x128xf32> to vector<1x16x128xf32>
    tpu.vector_store %arg5[%c0_19, %c0_20, %c0_21], %34 {strides = array<i32>} : memref<1x16x128xf32, #tpu.memory_space<vmem>>, vector<1x16x128xf32>,
    %cst_22 = arith.constant dense<0.000000e+00> : vector<128xf32>
    %35 = vector.multi_reduction <add>, %31, %cst_22 [0] : vector<16x128xf32> to vector<128xf32>
    %36 = vector.shape_cast %35 : vector<128xf32> to vector<1x128xf32>
    %c0_23 = arith.constant 0 : index
    %c0_24 = arith.constant 0 : index
    %c0_25 = arith.constant 0 : index
    %37 = vector.load %arg6[%c0_23, %c0_24, %c0_25] : memref<1x2x128xf32, #tpu.memory_space<vmem>>, vector<1x1x128xf32>
    %38 = vector.shape_cast %37 : vector<1x1x128xf32> to vector<1x128xf32>
    %39 = vector.shape_cast %36 : vector<1x128xf32> to vector<1x1x128xf32>
    tpu.vector_store %arg6[%c0_23, %c0_24, %c0_25], %39 {strides = array<i32>} : memref<1x2x128xf32, #tpu.memory_space<vmem>>, vector<1x1x128xf32>,
    %40 = arith.mulf %31, %31 : vector<16x128xf32>
    %cst_26 = arith.constant dense<0.000000e+00> : vector<128xf32>
    %41 = vector.multi_reduction <add>, %40, %cst_26 [0] : vector<16x128xf32> to vector<128xf32>
    %42 = vector.shape_cast %41 : vector<128xf32> to vector<1x128xf32>
    %c0_27 = arith.constant 0 : index
    %c1_28 = arith.constant 1 : index
    %c0_29 = arith.constant 0 : index
    %43 = vector.load %arg6[%c0_27, %c1_28, %c0_29] : memref<1x2x128xf32, #tpu.memory_space<vmem>>, vector<1x1x128xf32>
    %44 = vector.shape_cast %43 : vector<1x1x128xf32> to vector<1x128xf32>
    %45 = vector.shape_cast %42 : vector<1x128xf32> to vector<1x1x128xf32>
    tpu.vector_store %arg6[%c0_27, %c1_28, %c0_29], %45 {strides = array<i32>} : memref<1x2x128xf32, #tpu.memory_space<vmem>>, vector<1x1x128xf32>,
    return
  }
  func.func @transform_0(%arg0: i32) -> (i32, i32, i32) {
    %c0_i32 = arith.constant 0 : i32
    %c0_i32_0 = arith.constant 0 : i32
    %c0_i32_1 = arith.constant 0 : i32
    return %arg0, %c0_i32, %c0_i32_0 : i32, i32, i32
  }
  func.func @transform_1(%arg0: i32) -> (i32, i32) {
    %c0_i32 = arith.constant 0 : i32
    %c0_i32_0 = arith.constant 0 : i32
    %c0_i32_1 = arith.constant 0 : i32
    return %c0_i32, %c0_i32_0 : i32, i32
  }
  func.func @transform_2(%arg0: i32) -> (i32, i32) {
    %c0_i32 = arith.constant 0 : i32
    %c0_i32_0 = arith.constant 0 : i32
    %c0_i32_1 = arith.constant 0 : i32
    return %c0_i32, %c0_i32_0 : i32, i32
  }
  func.func @transform_3(%arg0: i32) -> (i32, i32, i32) {
    %c0_i32 = arith.constant 0 : i32
    %c0_i32_0 = arith.constant 0 : i32
    %c0_i32_1 = arith.constant 0 : i32
    %c0_i32_2 = arith.constant 0 : i32
    return %c0_i32, %c0_i32_0, %c0_i32_1 : i32, i32, i32
  }
  func.func @transform_4(%arg0: i32) -> (i32, i32, i32) {
    %c0_i32 = arith.constant 0 : i32
    %c0_i32_0 = arith.constant 0 : i32
    %c0_i32_1 = arith.constant 0 : i32
    return %arg0, %c0_i32, %c0_i32_0 : i32, i32, i32
  }
  func.func @transform_5(%arg0: i32) -> (i32, i32, i32) {
    %c0_i32 = arith.constant 0 : i32
    %c0_i32_0 = arith.constant 0 : i32
    %c0_i32_1 = arith.constant 0 : i32
    return %arg0, %c0_i32, %c0_i32_0 : i32, i32, i32
  }
}

</mosaic_0001>

<llo_original>
// kernel: tile.13
$region0: #{tile.13}
  #allocation0 [shape = 's32[1]{0}', space=sflag, size = 0x4, scoped, tag = 'scoped memory for tile.13']
  %s0 = inlined_call_operand.vmem [shape: f32[8], index: 0, kind: input, shape index: {}]
  %s1 = inlined_call_operand.vmem [shape: f32[16,8], index: 1, kind: output, shape index: {}]
  // Predicated region
  $region2: #{tile.13} parent=0 // pred_check
    _
  $region3: #{tile.13} parent=0 // pred_check_branch
    %3 = sbr.rel (0) target = $region5
  $region4: #{tile.13} parent=0 // pred_region
    _
  $region5: #{tile.13} parent=0 // pred_fallthru
    _
  %v4 = vld [vmem:[%s0] ss:$0 sm:$0xff]
  %5 = vst [vmem:[%s1] sm:$0xff] %v4
  %s6 = scalar_lea.vmem %s1, 8
  %7 = vst [vmem:[%s6] sm:$0xff] %v4

// kernel: tile.14
$region0: #{tile.14}
  %s0 = inlined_call_operand.vmem [shape: f32[16,8], index: 0, kind: input, shape index: {}]
  %s1 = inlined_call_operand.vmem [shape: f32[1,128], index: 1, kind: output, shape index: {}]
  $region1: #{tile.14} parent=0
    #allocation0 [shape = 'u8[4096]{0}', space=vmem, size = 0x1000, scoped, tag = 'scoped mem for output reshape']
    %v2 = vld [vmem:[%s0] sm:$0x1]
    %vm3 = vcmask 64512
    %4 = vst.msk [vmem:[#allocation0] sm:$0x1] %vm3, %v2
    %s5 = scalar_lea.vmem %s0, 15
    %v6 = vld [vmem:[%s5] sm:$0x1]
    %7 = vrot.lane.b32.xlu0 %v6, 120
    %v8 = vpop.permute.xlu0 %7
    %vm9 = vcmask 1048512
    %10 = vst.msk [vmem:[#allocation0] sm:$0x1] %vm9, %v8
    %s11 = scalar_lea.vmem %s0, 14
    %v12 = vld [vmem:[%s11] sm:$0x1]
    %13 = vrot.lane.b32.xlu0 %v12, 112
    %v14 = vpop.permute.xlu0 %13
    %vm15 = vcmask 982912
    %16 = vst.msk [vmem:[#allocation0] sm:$0x1] %vm15, %v14
    %s17 = scalar_lea.vmem %s0, 13
    %v18 = vld [vmem:[%s17] sm:$0x1]
    %19 = vrot.lane.b32.xlu0 %v18, 104
    %v20 = vpop.permute.xlu0 %19
    %vm21 = vcmask 917312
    %22 = vst.msk [vmem:[#allocation0] sm:$0x1] %vm21, %v20
    %s23 = scalar_lea.vmem %s0, 12
    %v24 = vld [vmem:[%s23] sm:$0x1]
    %25 = vrot.lane.b32.xlu0 %v24, 96
    %v26 = vpop.permute.xlu0 %25
    %vm27 = vcmask 851712
    %28 = vst.msk [vmem:[#allocation0] sm:$0x1] %vm27, %v26
    %s29 = scalar_lea.vmem %s0, 11
    %v30 = vld [vmem:[%s29] sm:$0x1]
    %31 = vrot.lane.b32.xlu0 %v30, 88
    %v32 = vpop.permute.xlu0 %31
    %vm33 = vcmask 786112
    %34 = vst.msk [vmem:[#allocation0] sm:$0x1] %vm33, %v32
    %s35 = scalar_lea.vmem %s0, 10
    %v36 = vld [vmem:[%s35] sm:$0x1]
    %37 = vrot.lane.b32.xlu0 %v36, 80
    %v38 = vpop.permute.xlu0 %37
    %vm39 = vcmask 720512
    %40 = vst.msk [vmem:[#allocation0] sm:$0x1] %vm39, %v38
    %s41 = scalar_lea.vmem %s0, 9
    %v42 = vld [vmem:[%s41] sm:$0x1]
    %43 = vrot.lane.b32.xlu0 %v42, 72
    %v44 = vpop.permute.xlu0 %43
    %vm45 = vcmask 654912
    %46 = vst.msk [vmem:[#allocation0] sm:$0x1] %vm45, %v44
    %s47 = scalar_lea.vmem %s0, 8
    %v48 = vld [vmem:[%s47] sm:$0x1]
    %49 = vrot.lane.b32.xlu0 %v48, 64
    %v50 = vpop.permute.xlu0 %49
    %vm51 = vcmask 589312
    %52 = vst.msk [vmem:[#allocation0] sm:$0x1] %vm51, %v50
    %s53 = scalar_lea.vmem %s0, 7
    %v54 = vld [vmem:[%s53] sm:$0x1]
    %55 = vrot.lane.b32.xlu0 %v54, 56
    %v56 = vpop.permute.xlu0 %55
    %vm57 = vcmask 523712
    %58 = vst.msk [vmem:[#allocation0] sm:$0x1] %vm57, %v56
    %s59 = scalar_lea.vmem %s0, 6
    %v60 = vld [vmem:[%s59] sm:$0x1]
    %61 = vrot.lane.b32.xlu0 %v60, 48
    %v62 = vpop.permute.xlu0 %61
    %vm63 = vcmask 458112
    %64 = vst.msk [vmem:[#allocation0] sm:$0x1] %vm63, %v62
    %s65 = scalar_lea.vmem %s0, 5
    %v66 = vld [vmem:[%s65] sm:$0x1]
    %67 = vrot.lane.b32.xlu0 %v66, 40
    %v68 = vpop.permute.xlu0 %67
    %vm69 = vcmask 392512
    %70 = vst.msk [vmem:[#allocation0] sm:$0x1] %vm69, %v68
    %s71 = scalar_lea.vmem %s0, 4
    %v72 = vld [vmem:[%s71] sm:$0x1]
    %73 = vrot.lane.b32.xlu0 %v72, 32
    %v74 = vpop.permute.xlu0 %73
    %vm75 = vcmask 326912
    %76 = vst.msk [vmem:[#allocation0] sm:$0x1] %vm75, %v74
    %s77 = scalar_lea.vmem %s0, 3
    %v78 = vld [vmem:[%s77] sm:$0x1]
    %79 = vrot.lane.b32.xlu0 %v78, 24
    %v80 = vpop.permute.xlu0 %79
    %vm81 = vcmask 261312
    %82 = vst.msk [vmem:[#allocation0] sm:$0x1] %vm81, %v80
    %s83 = scalar_lea.vmem %s0, 2
    %v84 = vld [vmem:[%s83] sm:$0x1]
    %85 = vrot.lane.b32.xlu0 %v84, 16
    %v86 = vpop.permute.xlu0 %85
    %vm87 = vcmask 195712
    %88 = vst.msk [vmem:[#allocation0] sm:$0x1] %vm87, %v86
    %s89 = scalar_lea.vmem %s0, 1
    %v90 = vld [vmem:[%s89] sm:$0x1]
    %91 = vrot.lane.b32.xlu0 %v90, 8
    %v92 = vpop.permute.xlu0 %91
    %vm93 = vcmask 130112
    %94 = vst.msk [vmem:[#allocation0] sm:$0x1] %vm93, %v92
    %s96 = sshll.u32 1, 1
    %s97 = ssub.s32 %s96, 1
    %v99 = vld [vmem:[#allocation0] sm:%s97]
    %s100 = sshll.u32 1, 1
    %s101 = ssub.s32 %s100, 1
    %102 = vst [vmem:[%s1] sm:%s101] %v99

// kernel: unet_block_nhwc.2
$region0: #{unet_block_nhwc.2}
  #allocation0 [shape = 'u32[]', space=smem, size = 0x4, offset = 0x4, fixed_abs, tag = 'smem constant byte address 0x4 - core index']
  #allocation1 [shape = 'u32[144,128]{1,0:T(1,128)}', space=vmem, size = 0x12000, scoped, tag = 'internal scratch']
  %s0 = inlined_call_operand.vmem [shape: f32[2,16,64], index: 0, kind: input, shape index: {}]
  %s1 = inlined_call_operand.vmem [shape: f32[3,64,128], index: 1, kind: input, shape index: {}]
  %s2 = inlined_call_operand.vmem [shape: f32[2,16,128], index: 2, kind: output, shape index: {0}]
  %s3 = inlined_call_operand.vmem [shape: f32[2,2,128], index: 3, kind: output, shape index: {1}]
  %4 = xla_tuple %s2, %s3
  %s5 = sld [smem:[#allocation0]]
  $region49: #{unet_block_nhwc.2} parent=0
    _
  %s7 = ssub.s32 1, %s5
  %s8 = scalar_select 0, %s7, %s5
  loop: start=0, step=1, limit=4
  $region2: #{unet_block_nhwc.2} parent=0 // loop_pre_header
    _
  $region3: #{unet_block_nhwc.2} parent=0 // loop_header
    %s10 = sphi 0, %s14
    %p11 = scmp.ge.s32.totalorder %s10, 4
    %s20 = sphi 0, %s22
    %s23 = sphi 0, %s20
    %s24 = sphi 0, %s23
    %s40 = sphi 0, %s24
    %s44 = sphi 0, %s44
    %s46 = sphi 0, %s44
    %s47 = sphi 0, %s46
    %s61 = sphi 0, %s47
    %s67 = sphi 0, %s69
    %s70 = sphi 0, %s67
    %s71 = sphi 0, %s70
    %s87 = sphi 0, %s71
    %s93 = sphi 0, %s95
    %s96 = sphi 0, %s93
    %s97 = sphi 0, %s96
    %s113 = sphi 0, %s97
  $region4: #{unet_block_nhwc.2} parent=0 // loop_header_branch
    %13 = sbr.rel (%p11) target = $region8
  $region5: #{unet_block_nhwc.2} parent=0 // loop_body
    %s15 = ssub.s32 %s10, 1
    %s16 = ssub.s32 %s10, 2
    %s17 = sadd.s32 %s10, 1
    %s18 = ssub.s32 %s10, %s17
    %p19 = scmp.eq.s32.totalorder %s18, 0
    %s21 = sadd.s32 %s20, 1
    %s22 = scalar_select %p19, %s20, %s21
    %p25 = pneg %p19
    %p26 = scmp.eq.s32.totalorder %s10, 1
    %p27 = por %p25, %p26
    %p28 = scmp.ne.s32.totalorder %s20, %s23
    %p29 = scmp.eq.s32.totalorder %s10, 0
    %p30 = por %p28, %p29
    %p31 = scmp.ne.s32.totalorder %s20, %s23
    %p32 = scmp.eq.s32.totalorder %s15, 1
    %p33 = por %p31, %p32
    %p34 = scmp.ne.s32.totalorder %s23, %s24
    %p35 = scmp.eq.s32.totalorder %s15, 0
    %p36 = por %p34, %p35
    %p37 = scmp.ne.s32.totalorder %s23, %s24
    %p38 = scmp.eq.s32.totalorder %s16, 1
    %p39 = por %p37, %p38
    %p41 = scmp.ne.s32.totalorder %s24, %s40
    %p42 = scmp.eq.s32.totalorder %s16, 0
    %p43 = por %p41, %p42
    %s45 = sadd.s32 %s44, 1
    %p48 = scmp.eq.s32.totalorder %s10, 1
    %p49 = scmp.ne.s32.totalorder %s44, %s46
    %p50 = scmp.eq.s32.totalorder %s10, 0
    %p51 = por %p49, %p50
    %p52 = scmp.ne.s32.totalorder %s44, %s46
    %p53 = scmp.eq.s32.totalorder %s15, 1
    %p54 = por %p52, %p53
    %p55 = scmp.ne.s32.totalorder %s46, %s47
    %p56 = scmp.eq.s32.totalorder %s15, 0
    %p57 = por %p55, %p56
    %p58 = scmp.ne.s32.totalorder %s46, %s47
    %p59 = scmp.eq.s32.totalorder %s16, 1
    %p60 = por %p58, %p59
    %p62 = scmp.ne.s32.totalorder %s47, %s61
    %p63 = scmp.eq.s32.totalorder %s16, 0
    %p64 = por %p62, %p63
    %s65 = ssub.s32 %s10, %s17
    %p66 = scmp.eq.s32.totalorder %s65, 0
    %s68 = sadd.s32 %s67, 1
    %s69 = scalar_select %p66, %s67, %s68
    %p72 = pneg %p66
    %p73 = scmp.eq.s32.totalorder %s10, 1
    %p74 = por %p72, %p73
    %p75 = scmp.ne.s32.totalorder %s67, %s70
    %p76 = scmp.eq.s32.totalorder %s10, 0
    %p77 = por %p75, %p76
    %p78 = scmp.ne.s32.totalorder %s67, %s70
    %p79 = scmp.eq.s32.totalorder %s15, 1
    %p80 = por %p78, %p79
    %p81 = scmp.ne.s32.totalorder %s70, %s71
    %p82 = scmp.eq.s32.totalorder %s15, 0
    %p83 = por %p81, %p82
    %p84 = scmp.ne.s32.totalorder %s70, %s71
    %p85 = scmp.eq.s32.totalorder %s16, 1
    %p86 = por %p84, %p85
    %p88 = scmp.ne.s32.totalorder %s71, %s87
    %p89 = scmp.eq.s32.totalorder %s16, 0
    %p90 = por %p88, %p89
    %s91 = ssub.s32 %s10, %s17
    %p92 = scmp.eq.s32.totalorder %s91, 0
    %s94 = sadd.s32 %s93, 1
    %s95 = scalar_select %p92, %s93, %s94
    %p98 = pneg %p92
    %p99 = scmp.eq.s32.totalorder %s10, 1
    %p100 = por %p98, %p99
    %p101 = scmp.ne.s32.totalorder %s93, %s96
    %p102 = scmp.eq.s32.totalorder %s10, 0
    %p103 = por %p101, %p102
    %p104 = scmp.ne.s32.totalorder %s93, %s96
    %p105 = scmp.eq.s32.totalorder %s15, 1
    %p106 = por %p104, %p105
    %p107 = scmp.ne.s32.totalorder %s96, %s97
    %p108 = scmp.eq.s32.totalorder %s15, 0
    %p109 = por %p107, %p108
    %p110 = scmp.ne.s32.totalorder %s96, %s97
    %p111 = scmp.eq.s32.totalorder %s16, 1
    %p112 = por %p110, %p111
    %p114 = scmp.ne.s32.totalorder %s97, %s113
    %p115 = scmp.eq.s32.totalorder %s16, 0
    %p116 = por %p114, %p115
    %p117 = scmp.le.s32.totalorder 1, %s10
    %p118 = scmp.lt.s32.totalorder %s10, 3
    %p119 = pnand %p117, %p118
    %p120 = pneg %p119
    // Predicated region
    $region9: #{unet_block_nhwc.2} parent=5 // pred_check
      _
    $region10: #{unet_block_nhwc.2} parent=5 // pred_check_branch
      %122 = sbr.rel (%p119) target = $region12
    $region11: #{unet_block_nhwc.2} parent=5 // pred_region
      %s123 = ssub.s32 %s10, 1
      // Predicated region
      $region13: #{unet_block_nhwc.2} parent=11 // pred_check
        %p124 = pneg %p57
      $region14: #{unet_block_nhwc.2} parent=11 // pred_check_branch
        %126 = sbr.rel (%p124) target = $region16
      $region15: #{unet_block_nhwc.2} parent=11 // pred_region
        _
      $region16: #{unet_block_nhwc.2} parent=11 // pred_fallthru
        _
    $region12: #{unet_block_nhwc.2} parent=5 // pred_fallthru
      _
    %p127 = scmp.lt.s32.totalorder %s10, 2
    // Predicated region
    $region17: #{unet_block_nhwc.2} parent=5 // pred_check
      %p128 = pneg %p127
    $region18: #{unet_block_nhwc.2} parent=5 // pred_check_branch
      %130 = sbr.rel (%p128) target = $region20
    $region19: #{unet_block_nhwc.2} parent=5 // pred_region
      // Predicated region
      $region21: #{unet_block_nhwc.2} parent=19 // pred_check
        %p131 = pneg %p30
      $region22: #{unet_block_nhwc.2} parent=19 // pred_check_branch
        %133 = sbr.rel (%p131) target = $region24
      $region23: #{unet_block_nhwc.2} parent=19 // pred_region
        %p134 = scmp.lt.s32.totalorder %s10, 1
        %s135 = scalar_select %p134, %s10, 1
        %s136 = smul.addr %s135, 2
        %s137 = smul.addr %s136, 8
        %s138 = scalar_lea.vmem %s0, %s137
      $region24: #{unet_block_nhwc.2} parent=19 // pred_fallthru
        _
    $region20: #{unet_block_nhwc.2} parent=5 // pred_fallthru
      _
    %p139 = scmp.le.s32.totalorder 1, %s10
    %p140 = scmp.lt.s32.totalorder %s10, 3
    %p141 = pnand %p139, %p140
    %p142 = pneg %p141
    // Predicated region
    $region25: #{unet_block_nhwc.2} parent=5 // pred_check
      _
    $region26: #{unet_block_nhwc.2} parent=5 // pred_check_branch
      %144 = sbr.rel (%p141) target = $region28
    $region27: #{unet_block_nhwc.2} parent=5 // pred_region
      %s145 = ssub.s32 %s10, 1
      %p146 = scmp.lt.s32.totalorder %s15, 1
      %s147 = scalar_select %p146, %s15, 1
      %s148 = smul.addr %s147, 2
      %s149 = smul.addr %s148, 8
      %s150 = scalar_lea.vmem %s0, %s149
      %p151 = pneg %p36
      %p152 = pneg %p33
      %p153 = pneg %p57
      %p154 = pneg %p54
      %p155 = pneg %p83
      %p156 = pneg %p80
      %p157 = scmp.lt.s32.totalorder %s15, 1
      %s158 = scalar_select %p157, %s15, 1
      %s159 = smul.addr %s158, 2
      %s160 = smul.addr %s159, 8
      %s161 = scalar_lea.vmem %s2, %s160
      %p162 = pneg %p109
      %p163 = pneg %p106
      %p164 = scmp.lt.s32.totalorder %s15, 1
      %s165 = scalar_select %p164, %s15, 1
      %s166 = smul.addr %s165, 2
      %s167 = scalar_lea.vmem %s3, %s166
      %p168 = scmp.lt.s32.totalorder %s15, 1
      %s169 = scalar_select %p168, %s15, 1
      %s170 = smul.addr %s169, 2
      %s171 = smul.addr %s170, 8
      %s172 = scalar_lea.vmem %s0, %s171
      %p173 = scmp.lt.s32.totalorder %s15, 1
      %s174 = scalar_select %p173, %s15, 1
      %s175 = smul.addr %s174, 2
      %s176 = smul.addr %s175, 8
      %s177 = scalar_lea.vmem %s2, %s176
      %p178 = scmp.lt.s32.totalorder %s15, 1
      %s179 = scalar_select %p178, %s15, 1
      %s180 = smul.addr %s179, 2
      %s181 = scalar_lea.vmem %s3, %s180
      %v182 = vld [vmem:[%s172] sm:$0xff]
      %v183 = vld [vmem:[%s172 + $0x8] sm:$0xff]
      %v184 = vld [vmem:[%s1] sm:$0xff]
      %v185 = vld [vmem:[%s1 + $0x8] sm:$0xff]
      %v186 = vld [vmem:[%s1 + $0x10] sm:$0xff]
      %v187 = vld [vmem:[%s1 + $0x18] sm:$0xff]
      %v188 = vld [vmem:[%s1 + $0x20] sm:$0xff]
      %v189 = vld [vmem:[%s1 + $0x28] sm:$0xff]
      %v190 = vld [vmem:[%s1 + $0x30] sm:$0xff]
      %v191 = vld [vmem:[%s1 + $0x38] sm:$0xff]
      %vm192 = vcmask 523264
      %v194 = vsel %vm192, %v182, 0
      %v197 = vsel %vm192, %v183, 0
      %199 = vmatprep.subr.mxu0 0.0
      %200 = vmatpush1.msra.mxu0 0.0
      %201 = vmatprep.subr.mxu0 0.0
      %202 = vmatpush1.msra.mxu0 0.0
      %203 = vmatprep.subr.mxu0 0.0
      %204 = vmatpush1.msra.mxu0 0.0
      %205 = vmatprep.subr.mxu0 0.0
      %206 = vmatpush1.msra.mxu0 0.0
      %207 = vmatprep.subr.mxu0 0.0
      %208 = vmatpush1.msra.mxu0 0.0
      %209 = vmatprep.subr.mxu0 0.0
      %210 = vmatpush1.msra.mxu0 0.0
      %211 = vmatprep.subr.mxu0 0.0
      %212 = vmatpush1.msra.mxu0 0.0
      %213 = vmatprep.subr.mxu0 0.0
      %214 = vmatpush1.msra.mxu0 0.0
      %215 = vmatprep.subr.mxu0 0.0
      %216 = vmatpush1.msra.mxu0 %v191
      %217 = vmatprep.subr.mxu0 0.0
      %218 = vmatpush1.msra.mxu0 %v190
      %219 = vmatprep.subr.mxu0 0.0
      %220 = vmatpush1.msra.mxu0 %v189
      %221 = vmatprep.subr.mxu0 0.0
      %222 = vmatpush1.msra.mxu0 %v188
      %223 = vmatprep.subr.mxu0 0.0
      %224 = vmatpush1.msra.mxu0 %v187
      %225 = vmatprep.subr.mxu0 0.0
      %226 = vmatpush1.msra.mxu0 %v186
      %227 = vmatprep.subr.mxu0 0.0
      %228 = vmatpush1.msra.mxu0 %v185
      %229 = vmatprep.subr.mxu0 0.0
      %230 = vmatpush1.msra.mxu0 %v184
      %231 = vmatprep.subr.mxu0 0.0
      %232 = vmatpush2.msra.mxu0 0.0
      %233 = vmatprep.subr.mxu0 0.0
      %234 = vmatpush2.msra.mxu0 0.0
      %235 = vmatprep.subr.mxu0 0.0
      %236 = vmatpush2.msra.mxu0 0.0
      %237 = vmatprep.subr.mxu0 0.0
      %238 = vmatpush2.msra.mxu0 0.0
      %239 = vmatprep.subr.mxu0 0.0
      %240 = vmatpush2.msra.mxu0 0.0
      %241 = vmatprep.subr.mxu0 0.0
      %242 = vmatpush2.msra.mxu0 0.0
      %243 = vmatprep.subr.mxu0 0.0
      %244 = vmatpush2.msra.mxu0 0.0
      %245 = vmatprep.subr.mxu0 0.0
      %246 = vmatpush2.msra.mxu0 0.0
      %247 = vmatprep.subr.mxu0 0.0
      %248 = vmatpush2.msra.mxu0 0.0
      %249 = vmatprep.subr.mxu0 0.0
      %250 = vmatpush2.msra.mxu0 0.0
      %251 = vmatprep.subr.mxu0 0.0
      %252 = vmatpush2.msra.mxu0 0.0
      %253 = vmatprep.subr.mxu0 0.0
      %254 = vmatpush2.msra.mxu0 0.0
      %255 = vmatprep.subr.mxu0 0.0
      %256 = vmatpush2.msra.mxu0 0.0
      %257 = vmatprep.subr.mxu0 0.0
      %258 = vmatpush2.msra.mxu0 0.0
      %259 = vmatprep.subr.mxu0 0.0
      %260 = vmatpush2.msra.mxu0 0.0
      %261 = vmatprep.subr.mxu0 0.0
      %262 = vmatpush2.msra.mxu0 0.0
      %263 = vmatprep.mubr.f32.mxu0 0.0
      %264 = vmatmul.mubr.f32.gmra.mxu0 %v194
      %v265 = vpop.f32.mrf.mxu0
      %v266 = vadd.f32 0.0, %v265
      %v267 = vpop.f32.mrf.mxu0
      %268 = vmatprep.mubr.f32.mxu0 0.0
      %269 = vmatmul.mubr.f32.gmra.mxu0 %v197
      %v270 = vpop.f32.mrf.mxu0
      %v271 = vadd.f32 0.0, %v270
      %v272 = vpop.f32.mrf.mxu0
      %273 = vdwg.mxu0
      %s274 = scalar_lea.vmem %s1, 64
      %v275 = vld [vmem:[%s274] sm:$0xff]
      %v276 = vld [vmem:[%s274 + $0x8] sm:$0xff]
      %v277 = vld [vmem:[%s274 + $0x10] sm:$0xff]
      %v278 = vld [vmem:[%s274 + $0x18] sm:$0xff]
      %v279 = vld [vmem:[%s274 + $0x20] sm:$0xff]
      %v280 = vld [vmem:[%s274 + $0x28] sm:$0xff]
      %v281 = vld [vmem:[%s274 + $0x30] sm:$0xff]
      %v282 = vld [vmem:[%s274 + $0x38] sm:$0xff]
      %s283 = scalar_lea.vmem %s1, 128
      %v284 = vld [vmem:[%s283] sm:$0xff]
      %v285 = vld [vmem:[%s283 + $0x8] sm:$0xff]
      %v286 = vld [vmem:[%s283 + $0x10] sm:$0xff]
      %v287 = vld [vmem:[%s283 + $0x18] sm:$0xff]
      %v288 = vld [vmem:[%s283 + $0x20] sm:$0xff]
      %v289 = vld [vmem:[%s283 + $0x28] sm:$0xff]
      %v290 = vld [vmem:[%s283 + $0x30] sm:$0xff]
      %v291 = vld [vmem:[%s283 + $0x38] sm:$0xff]
      %292 = vmatprep.subr.mxu0 0.0
      %293 = vmatpush1.msra.mxu0 0.0
      %294 = vmatprep.subr.mxu0 0.0
      %295 = vmatpush1.msra.mxu0 0.0
      %296 = vmatprep.subr.mxu0 0.0
      %297 = vmatpush1.msra.mxu0 0.0
      %298 = vmatprep.subr.mxu0 0.0
      %299 = vmatpush1.msra.mxu0 0.0
      %300 = vmatprep.subr.mxu0 0.0
      %301 = vmatpush1.msra.mxu0 0.0
      %302 = vmatprep.subr.mxu0 0.0
      %303 = vmatpush1.msra.mxu0 0.0
      %304 = vmatprep.subr.mxu0 0.0
      %305 = vmatpush1.msra.mxu0 0.0
      %306 = vmatprep.subr.mxu0 0.0
      %307 = vmatpush1.msra.mxu0 0.0
      %308 = vmatprep.subr.mxu0 0.0
      %309 = vmatpush1.msra.mxu0 %v291
      %310 = vmatprep.subr.mxu0 0.0
      %311 = vmatpush1.msra.mxu0 %v290
      %312 = vmatprep.subr.mxu0 0.0
      %313 = vmatpush1.msra.mxu0 %v289
      %314 = vmatprep.subr.mxu0 0.0
      %315 = vmatpush1.msra.mxu0 %v288
      %316 = vmatprep.subr.mxu0 0.0
      %317 = vmatpush1.msra.mxu0 %v287
      %318 = vmatprep.subr.mxu0 0.0
      %319 = vmatpush1.msra.mxu0 %v286
      %320 = vmatprep.subr.mxu0 0.0
      %321 = vmatpush1.msra.mxu0 %v285
      %322 = vmatprep.subr.mxu0 0.0
      %323 = vmatpush1.msra.mxu0 %v284
      %324 = vmatprep.subr.mxu0 0.0
      %325 = vmatpush2.msra.mxu0 0.0
      %326 = vmatprep.subr.mxu0 0.0
      %327 = vmatpush2.msra.mxu0 0.0
      %328 = vmatprep.subr.mxu0 0.0
      %329 = vmatpush2.msra.mxu0 0.0
      %330 = vmatprep.subr.mxu0 0.0
      %331 = vmatpush2.msra.mxu0 0.0
      %332 = vmatprep.subr.mxu0 0.0
      %333 = vmatpush2.msra.mxu0 0.0
      %334 = vmatprep.subr.mxu0 0.0
      %335 = vmatpush2.msra.mxu0 0.0
      %336 = vmatprep.subr.mxu0 0.0
      %337 = vmatpush2.msra.mxu0 0.0
      %338 = vmatprep.subr.mxu0 0.0
      %339 = vmatpush2.msra.mxu0 0.0
      %340 = vmatprep.subr.mxu0 0.0
      %341 = vmatpush2.msra.mxu0 0.0
      %342 = vmatprep.subr.mxu0 0.0
      %343 = vmatpush2.msra.mxu0 0.0
      %344 = vmatprep.subr.mxu0 0.0
      %345 = vmatpush2.msra.mxu0 0.0
      %346 = vmatprep.subr.mxu0 0.0
      %347 = vmatpush2.msra.mxu0 0.0
      %348 = vmatprep.subr.mxu0 0.0
      %349 = vmatpush2.msra.mxu0 0.0
      %350 = vmatprep.subr.mxu0 0.0
      %351 = vmatpush2.msra.mxu0 0.0
      %352 = vmatprep.subr.mxu0 0.0
      %353 = vmatpush2.msra.mxu0 0.0
      %354 = vmatprep.subr.mxu0 0.0
      %355 = vmatpush2.msra.mxu0 0.0
      %356 = vmatprep.mubr.f32.mxu0 0.0
      %357 = vmatmul.mubr.f32.gmra.mxu0 %v194
      %v358 = vpop.f32.mrf.mxu0
      %v359 = vadd.f32 0.0, %v358
      %v360 = vpop.f32.mrf.mxu0
      %361 = vmatprep.mubr.f32.mxu0 0.0
      %362 = vmatmul.mubr.f32.gmra.mxu0 %v197
      %v363 = vpop.f32.mrf.mxu0
      %v364 = vadd.f32 0.0, %v363
      %v365 = vpop.f32.mrf.mxu0
      %366 = vdwg.mxu0
      %v367 = vlaneseq
      %v368 = vshrl.u32 %v367, 7
      %v369 = vadd.s32 %v368, 8
      %vm370 = vcmp.gt.s32.totalorder %v368, 0
      %vm371 = vcmp.gt.s32.totalorder %v369, 0
      %v372 = vrot.slane %v266, 7
      %v373 = vrot.slane %v271, 7
      %vm374 = vcmp.lt.s32.totalorder %v368, 1
      %v375 = vsel %vm374, %v372, %v373
      %v376 = vsel %vm374, %v373, %v372
      %v377 = vsel %vm370, %v376, 0.0
      %v378 = vsel %vm371, %v375, 0.0
      %379 = vmatprep.subr.mxu0 0.0
      %380 = vmatpush1.msra.mxu0 0.0
      %381 = vmatprep.subr.mxu0 0.0
      %382 = vmatpush1.msra.mxu0 0.0
      %383 = vmatprep.subr.mxu0 0.0
      %384 = vmatpush1.msra.mxu0 0.0
      %385 = vmatprep.subr.mxu0 0.0
      %386 = vmatpush1.msra.mxu0 0.0
      %387 = vmatprep.subr.mxu0 0.0
      %388 = vmatpush1.msra.mxu0 0.0
      %389 = vmatprep.subr.mxu0 0.0
      %390 = vmatpush1.msra.mxu0 0.0
      %391 = vmatprep.subr.mxu0 0.0
      %392 = vmatpush1.msra.mxu0 0.0
      %393 = vmatprep.subr.mxu0 0.0
      %394 = vmatpush1.msra.mxu0 0.0
      %395 = vmatprep.subr.mxu0 0.0
      %396 = vmatpush1.msra.mxu0 %v282
      %397 = vmatprep.subr.mxu0 0.0
      %398 = vmatpush1.msra.mxu0 %v281
      %399 = vmatprep.subr.mxu0 0.0
      %400 = vmatpush1.msra.mxu0 %v280
      %401 = vmatprep.subr.mxu0 0.0
      %402 = vmatpush1.msra.mxu0 %v279
      %403 = vmatprep.subr.mxu0 0.0
      %404 = vmatpush1.msra.mxu0 %v278
      %405 = vmatprep.subr.mxu0 0.0
      %406 = vmatpush1.msra.mxu0 %v277
      %407 = vmatprep.subr.mxu0 0.0
      %408 = vmatpush1.msra.mxu0 %v276
      %409 = vmatprep.subr.mxu0 0.0
      %410 = vmatpush1.msra.mxu0 %v275
      %411 = vmatprep.subr.mxu0 0.0
      %412 = vmatpush2.msra.mxu0 0.0
      %413 = vmatprep.subr.mxu0 0.0
      %414 = vmatpush2.msra.mxu0 0.0
      %415 = vmatprep.subr.mxu0 0.0
      %416 = vmatpush2.msra.mxu0 0.0
      %417 = vmatprep.subr.mxu0 0.0
      %418 = vmatpush2.msra.mxu0 0.0
      %419 = vmatprep.subr.mxu0 0.0
      %420 = vmatpush2.msra.mxu0 0.0
      %421 = vmatprep.subr.mxu0 0.0
      %422 = vmatpush2.msra.mxu0 0.0
      %423 = vmatprep.subr.mxu0 0.0
      %424 = vmatpush2.msra.mxu0 0.0
      %425 = vmatprep.subr.mxu0 0.0
      %426 = vmatpush2.msra.mxu0 0.0
      %427 = vmatprep.subr.mxu0 0.0
      %428 = vmatpush2.msra.mxu0 0.0
      %429 = vmatprep.subr.mxu0 0.0
      %430 = vmatpush2.msra.mxu0 0.0
      %431 = vmatprep.subr.mxu0 0.0
      %432 = vmatpush2.msra.mxu0 0.0
      %433 = vmatprep.subr.mxu0 0.0
      %434 = vmatpush2.msra.mxu0 0.0
      %435 = vmatprep.subr.mxu0 0.0
      %436 = vmatpush2.msra.mxu0 0.0
      %437 = vmatprep.subr.mxu0 0.0
      %438 = vmatpush2.msra.mxu0 0.0
      %439 = vmatprep.subr.mxu0 0.0
      %440 = vmatpush2.msra.mxu0 0.0
      %441 = vmatprep.subr.mxu0 0.0
      %442 = vmatpush2.msra.mxu0 0.0
      %443 = vmatprep.mubr.f32.mxu0 0.0
      %444 = vmatmul.mubr.f32.gmra.mxu0 %v194
      %v445 = vpop.f32.mrf.mxu0
      %v446 = vadd.f32 %v377, %v445
      %v447 = vpop.f32.mrf.mxu0
      %448 = vmatprep.mubr.f32.mxu0 0.0
      %449 = vmatmul.mubr.f32.gmra.mxu0 %v197
      %v450 = vpop.f32.mrf.mxu0
      %v451 = vadd.f32 %v378, %v450
      %v452 = vpop.f32.mrf.mxu0
      %453 = vdwg.mxu0
      %vm454 = vcmp.lt.s32.totalorder %v368, 15
      %vm455 = vcmp.lt.s32.totalorder %v369, 15
      %v456 = vrot.slane %v359, 1
      %v457 = vrot.slane %v364, 1
      %vm458 = vcmp.lt.s32.totalorder %v368, 7
      %v459 = vsel %vm458, %v456, %v457
      %v460 = vsel %vm458, %v457, %v456
      %v461 = vsel %vm454, %v459, 0.0
      %v462 = vsel %vm455, %v460, 0.0
      %v463 = vadd.f32 %v446, %v461
      %v464 = vadd.f32 %v451, %v462
      %465 = vst [vmem:[%s177] sm:$0xff] %v463
      %466 = vst [vmem:[%s177 + $0x8] sm:$0xff] %v464
      %v467 = vadd.f32 %v463, %v464
      %v468 = vrot.slane %v467, 4
      %v469 = vadd.f32 %v467, %v468
      %v470 = vrot.slane %v469, 2
      %v471 = vadd.f32 %v469, %v470
      %v472 = vrot.slane %v471, 1
      %v473 = vadd.f32 %v471, %v472
      %474 = vst [vmem:[%s181] sm:$0x1] %v473
      %v475 = vmul.f32 %v463, %v463
      %v476 = vmul.f32 %v464, %v464
      %v477 = vadd.f32 %v475, %v476
      %v478 = vrot.slane %v477, 4
      %v479 = vadd.f32 %v477, %v478
      %v480 = vrot.slane %v479, 2
      %v481 = vadd.f32 %v479, %v480
      %v482 = vrot.slane %v481, 1
      %v483 = vadd.f32 %v481, %v482
      %484 = vst [vmem:[%s181 + $0x1] sm:$0x1] %v483
      %p485 = scmp.lt.s32.totalorder %s15, 1
      %s486 = scalar_select %p485, %s15, 1
      %s487 = smul.addr %s486, 2
      %s488 = smul.addr %s487, 8
      %s489 = scalar_lea.vmem %s2, %s488
      %p490 = scmp.lt.s32.totalorder %s15, 1
      %s491 = scalar_select %p490, %s15, 1
      %s492 = smul.addr %s491, 2
      %s493 = scalar_lea.vmem %s3, %s492
      // Predicated region
      $region29: #{unet_block_nhwc.2} parent=27 // pred_check
        %p494 = pneg %p80
      $region30: #{unet_block_nhwc.2} parent=27 // pred_check_branch
        %496 = sbr.rel (%p494) target = $region32
      $region31: #{unet_block_nhwc.2} parent=27 // pred_region
        _
      $region32: #{unet_block_nhwc.2} parent=27 // pred_fallthru
        _
      // Predicated region
      $region33: #{unet_block_nhwc.2} parent=27 // pred_check
        %p497 = pneg %p106
      $region34: #{unet_block_nhwc.2} parent=27 // pred_check_branch
        %499 = sbr.rel (%p497) target = $region36
      $region35: #{unet_block_nhwc.2} parent=27 // pred_region
        _
      $region36: #{unet_block_nhwc.2} parent=27 // pred_fallthru
        _
    $region28: #{unet_block_nhwc.2} parent=5 // pred_fallthru
      _
    %p500 = scmp.le.s32.totalorder 2, %s10
    // Predicated region
    $region37: #{unet_block_nhwc.2} parent=5 // pred_check
      %p501 = pneg %p500
    $region38: #{unet_block_nhwc.2} parent=5 // pred_check_branch
      %503 = sbr.rel (%p501) target = $region40
    $region39: #{unet_block_nhwc.2} parent=5 // pred_region
      %s504 = ssub.s32 %s10, 2
      // Predicated region
      $region41: #{unet_block_nhwc.2} parent=39 // pred_check
        %p505 = pneg %p86
      $region42: #{unet_block_nhwc.2} parent=39 // pred_check_branch
        %507 = sbr.rel (%p505) target = $region44
      $region43: #{unet_block_nhwc.2} parent=39 // pred_region
        %p508 = scmp.lt.s32.totalorder %s16, 1
        %s509 = scalar_select %p508, %s16, 1
        %s510 = smul.addr %s509, 2
        %s511 = smul.addr %s510, 8
        %s512 = scalar_lea.vmem %s2, %s511
      $region44: #{unet_block_nhwc.2} parent=39 // pred_fallthru
        _
      // Predicated region
      $region45: #{unet_block_nhwc.2} parent=39 // pred_check
        %p513 = pneg %p112
      $region46: #{unet_block_nhwc.2} parent=39 // pred_check_branch
        %515 = sbr.rel (%p513) target = $region48
      $region47: #{unet_block_nhwc.2} parent=39 // pred_region
        %p516 = scmp.lt.s32.totalorder %s16, 1
        %s517 = scalar_select %p516, %s16, 1
        %s518 = smul.addr %s517, 2
        %s519 = scalar_lea.vmem %s3, %s518
      $region48: #{unet_block_nhwc.2} parent=39 // pred_fallthru
        _
    $region40: #{unet_block_nhwc.2} parent=5 // pred_fallthru
      _
  $region6: #{unet_block_nhwc.2} parent=0 // loop_footer
    %s14 = sadd.s32 1, %s10
  $region7: #{unet_block_nhwc.2} parent=0 // loop_footer_branch
    %9 = sbr.rel target = $region3
  $region8: #{unet_block_nhwc.2} parent=0 // loop_exit
    _

// kernel: unet_block_nhwc.3
$region0: #{unet_block_nhwc.3}
  #allocation0 [shape = 'u32[]', space=smem, size = 0x4, offset = 0x4, fixed_abs, tag = 'smem constant byte address 0x4 - core index']
  #allocation1 [shape = 'u32[144,128]{1,0:T(1,128)}', space=vmem, size = 0x12000, scoped, tag = 'internal scratch']
  %s0 = inlined_call_operand.vmem [shape: f32[2,16,128], index: 0, kind: input, shape index: {}]
  %s1 = inlined_call_operand.vmem [shape: f32[1,128], index: 1, kind: input, shape index: {}]
  %s2 = inlined_call_operand.vmem [shape: f32[1,128], index: 2, kind: input, shape index: {}]
  %s3 = inlined_call_operand.vmem [shape: f32[3,128,128], index: 3, kind: input, shape index: {}]
  %s4 = inlined_call_operand.vmem [shape: f32[2,16,128], index: 4, kind: output, shape index: {0}]
  %s5 = inlined_call_operand.vmem [shape: f32[2,2,128], index: 5, kind: output, shape index: {1}]
  %6 = xla_tuple %s4, %s5
  %s7 = sld [smem:[#allocation0]]
  $region57: #{unet_block_nhwc.3} parent=0
    _
  %s9 = ssub.s32 1, %s7
  %s10 = scalar_select 0, %s9, %s7
  loop: start=0, step=1, limit=4
  $region2: #{unet_block_nhwc.3} parent=0 // loop_pre_header
    _
  $region3: #{unet_block_nhwc.3} parent=0 // loop_header
    %s12 = sphi 0, %s16
    %p13 = scmp.ge.s32.totalorder %s12, 4
    %s22 = sphi 0, %s24
    %s25 = sphi 0, %s22
    %s26 = sphi 0, %s25
    %s42 = sphi 0, %s26
    %s46 = sphi 0, %s46
    %s48 = sphi 0, %s46
    %s49 = sphi 0, %s48
    %s63 = sphi 0, %s49
    %s67 = sphi 0, %s67
    %s69 = sphi 0, %s67
    %s70 = sphi 0, %s69
    %s84 = sphi 0, %s70
    %s88 = sphi 0, %s88
    %s90 = sphi 0, %s88
    %s91 = sphi 0, %s90
    %s105 = sphi 0, %s91
    %s111 = sphi 0, %s113
    %s114 = sphi 0, %s111
    %s115 = sphi 0, %s114
    %s131 = sphi 0, %s115
    %s137 = sphi 0, %s139
    %s140 = sphi 0, %s137
    %s141 = sphi 0, %s140
    %s157 = sphi 0, %s141
  $region4: #{unet_block_nhwc.3} parent=0 // loop_header_branch
    %15 = sbr.rel (%p13) target = $region8
  $region5: #{unet_block_nhwc.3} parent=0 // loop_body
    %s17 = ssub.s32 %s12, 1
    %s18 = ssub.s32 %s12, 2
    %s19 = sadd.s32 %s12, 1
    %s20 = ssub.s32 %s12, %s19
    %p21 = scmp.eq.s32.totalorder %s20, 0
    %s23 = sadd.s32 %s22, 1
    %s24 = scalar_select %p21, %s22, %s23
    %p27 = pneg %p21
    %p28 = scmp.eq.s32.totalorder %s12, 1
    %p29 = por %p27, %p28
    %p30 = scmp.ne.s32.totalorder %s22, %s25
    %p31 = scmp.eq.s32.totalorder %s12, 0
    %p32 = por %p30, %p31
    %p33 = scmp.ne.s32.totalorder %s22, %s25
    %p34 = scmp.eq.s32.totalorder %s17, 1
    %p35 = por %p33, %p34
    %p36 = scmp.ne.s32.totalorder %s25, %s26
    %p37 = scmp.eq.s32.totalorder %s17, 0
    %p38 = por %p36, %p37
    %p39 = scmp.ne.s32.totalorder %s25, %s26
    %p40 = scmp.eq.s32.totalorder %s18, 1
    %p41 = por %p39, %p40
    %p43 = scmp.ne.s32.totalorder %s26, %s42
    %p44 = scmp.eq.s32.totalorder %s18, 0
    %p45 = por %p43, %p44
    %s47 = sadd.s32 %s46, 1
    %p50 = scmp.eq.s32.totalorder %s12, 1
    %p51 = scmp.ne.s32.totalorder %s46, %s48
    %p52 = scmp.eq.s32.totalorder %s12, 0
    %p53 = por %p51, %p52
    %p54 = scmp.ne.s32.totalorder %s46, %s48
    %p55 = scmp.eq.s32.totalorder %s17, 1
    %p56 = por %p54, %p55
    %p57 = scmp.ne.s32.totalorder %s48, %s49
    %p58 = scmp.eq.s32.totalorder %s17, 0
    %p59 = por %p57, %p58
    %p60 = scmp.ne.s32.totalorder %s48, %s49
    %p61 = scmp.eq.s32.totalorder %s18, 1
    %p62 = por %p60, %p61
    %p64 = scmp.ne.s32.totalorder %s49, %s63
    %p65 = scmp.eq.s32.totalorder %s18, 0
    %p66 = por %p64, %p65
    %s68 = sadd.s32 %s67, 1
    %p71 = scmp.eq.s32.totalorder %s12, 1
    %p72 = scmp.ne.s32.totalorder %s67, %s69
    %p73 = scmp.eq.s32.totalorder %s12, 0
    %p74 = por %p72, %p73
    %p75 = scmp.ne.s32.totalorder %s67, %s69
    %p76 = scmp.eq.s32.totalorder %s17, 1
    %p77 = por %p75, %p76
    %p78 = scmp.ne.s32.totalorder %s69, %s70
    %p79 = scmp.eq.s32.totalorder %s17, 0
    %p80 = por %p78, %p79
    %p81 = scmp.ne.s32.totalorder %s69, %s70
    %p82 = scmp.eq.s32.totalorder %s18, 1
    %p83 = por %p81, %p82
    %p85 = scmp.ne.s32.totalorder %s70, %s84
    %p86 = scmp.eq.s32.totalorder %s18, 0
    %p87 = por %p85, %p86
    %s89 = sadd.s32 %s88, 1
    %p92 = scmp.eq.s32.totalorder %s12, 1
    %p93 = scmp.ne.s32.totalorder %s88, %s90
    %p94 = scmp.eq.s32.totalorder %s12, 0
    %p95 = por %p93, %p94
    %p96 = scmp.ne.s32.totalorder %s88, %s90
    %p97 = scmp.eq.s32.totalorder %s17, 1
    %p98 = por %p96, %p97
    %p99 = scmp.ne.s32.totalorder %s90, %s91
    %p100 = scmp.eq.s32.totalorder %s17, 0
    %p101 = por %p99, %p100
    %p102 = scmp.ne.s32.totalorder %s90, %s91
    %p103 = scmp.eq.s32.totalorder %s18, 1
    %p104 = por %p102, %p103
    %p106 = scmp.ne.s32.totalorder %s91, %s105
    %p107 = scmp.eq.s32.totalorder %s18, 0
    %p108 = por %p106, %p107
    %s109 = ssub.s32 %s12, %s19
    %p110 = scmp.eq.s32.totalorder %s109, 0
    %s112 = sadd.s32 %s111, 1
    %s113 = scalar_select %p110, %s111, %s112
    %p116 = pneg %p110
    %p117 = scmp.eq.s32.totalorder %s12, 1
    %p118 = por %p116, %p117
    %p119 = scmp.ne.s32.totalorder %s111, %s114
    %p120 = scmp.eq.s32.totalorder %s12, 0
    %p121 = por %p119, %p120
    %p122 = scmp.ne.s32.totalorder %s111, %s114
    %p123 = scmp.eq.s32.totalorder %s17, 1
    %p124 = por %p122, %p123
    %p125 = scmp.ne.s32.totalorder %s114, %s115
    %p126 = scmp.eq.s32.totalorder %s17, 0
    %p127 = por %p125, %p126
    %p128 = scmp.ne.s32.totalorder %s114, %s115
    %p129 = scmp.eq.s32.totalorder %s18, 1
    %p130 = por %p128, %p129
    %p132 = scmp.ne.s32.totalorder %s115, %s131
    %p133 = scmp.eq.s32.totalorder %s18, 0
    %p134 = por %p132, %p133
    %s135 = ssub.s32 %s12, %s19
    %p136 = scmp.eq.s32.totalorder %s135, 0
    %s138 = sadd.s32 %s137, 1
    %s139 = scalar_select %p136, %s137, %s138
    %p142 = pneg %p136
    %p143 = scmp.eq.s32.totalorder %s12, 1
    %p144 = por %p142, %p143
    %p145 = scmp.ne.s32.totalorder %s137, %s140
    %p146 = scmp.eq.s32.totalorder %s12, 0
    %p147 = por %p145, %p146
    %p148 = scmp.ne.s32.totalorder %s137, %s140
    %p149 = scmp.eq.s32.totalorder %s17, 1
    %p150 = por %p148, %p149
    %p151 = scmp.ne.s32.totalorder %s140, %s141
    %p152 = scmp.eq.s32.totalorder %s17, 0
    %p153 = por %p151, %p152
    %p154 = scmp.ne.s32.totalorder %s140, %s141
    %p155 = scmp.eq.s32.totalorder %s18, 1
    %p156 = por %p154, %p155
    %p158 = scmp.ne.s32.totalorder %s141, %s157
    %p159 = scmp.eq.s32.totalorder %s18, 0
    %p160 = por %p158, %p159
    %p161 = scmp.le.s32.totalorder 1, %s12
    %p162 = scmp.lt.s32.totalorder %s12, 3
    %p163 = pnand %p161, %p162
    %p164 = pneg %p163
    // Predicated region
    $region9: #{unet_block_nhwc.3} parent=5 // pred_check
      _
    $region10: #{unet_block_nhwc.3} parent=5 // pred_check_branch
      %166 = sbr.rel (%p163) target = $region12
    $region11: #{unet_block_nhwc.3} parent=5 // pred_region
      %s167 = ssub.s32 %s12, 1
      // Predicated region
      $region13: #{unet_block_nhwc.3} parent=11 // pred_check
        %p168 = pneg %p59
      $region14: #{unet_block_nhwc.3} parent=11 // pred_check_branch
        %170 = sbr.rel (%p168) target = $region16
      $region15: #{unet_block_nhwc.3} parent=11 // pred_region
        _
      $region16: #{unet_block_nhwc.3} parent=11 // pred_fallthru
        _
      // Predicated region
      $region17: #{unet_block_nhwc.3} parent=11 // pred_check
        %p171 = pneg %p80
      $region18: #{unet_block_nhwc.3} parent=11 // pred_check_branch
        %173 = sbr.rel (%p171) target = $region20
      $region19: #{unet_block_nhwc.3} parent=11 // pred_region
        _
      $region20: #{unet_block_nhwc.3} parent=11 // pred_fallthru
        _
      // Predicated region
      $region21: #{unet_block_nhwc.3} parent=11 // pred_check
        %p174 = pneg %p101
      $region22: #{unet_block_nhwc.3} parent=11 // pred_check_branch
        %176 = sbr.rel (%p174) target = $region24
      $region23: #{unet_block_nhwc.3} parent=11 // pred_region
        _
      $region24: #{unet_block_nhwc.3} parent=11 // pred_fallthru
        _
    $region12: #{unet_block_nhwc.3} parent=5 // pred_fallthru
      _
    %p177 = scmp.lt.s32.totalorder %s12, 2
    // Predicated region
    $region25: #{unet_block_nhwc.3} parent=5 // pred_check
      %p178 = pneg %p177
    $region26: #{unet_block_nhwc.3} parent=5 // pred_check_branch
      %180 = sbr.rel (%p178) target = $region28
    $region27: #{unet_block_nhwc.3} parent=5 // pred_region
      // Predicated region
      $region29: #{unet_block_nhwc.3} parent=27 // pred_check
        %p181 = pneg %p32
      $region30: #{unet_block_nhwc.3} parent=27 // pred_check_branch
        %183 = sbr.rel (%p181) target = $region32
      $region31: #{unet_block_nhwc.3} parent=27 // pred_region
        %p184 = scmp.lt.s32.totalorder %s12, 1
        %s185 = scalar_select %p184, %s12, 1
        %s186 = smul.addr %s185, 2
        %s187 = smul.addr %s186, 8
        %s188 = scalar_lea.vmem %s0, %s187
      $region32: #{unet_block_nhwc.3} parent=27 // pred_fallthru
        _
    $region28: #{unet_block_nhwc.3} parent=5 // pred_fallthru
      _
    %p189 = scmp.le.s32.totalorder 1, %s12
    %p190 = scmp.lt.s32.totalorder %s12, 3
    %p191 = pnand %p189, %p190
    %p192 = pneg %p191
    // Predicated region
    $region33: #{unet_block_nhwc.3} parent=5 // pred_check
      _
    $region34: #{unet_block_nhwc.3} parent=5 // pred_check_branch
      %194 = sbr.rel (%p191) target = $region36
    $region35: #{unet_block_nhwc.3} parent=5 // pred_region
      %s195 = ssub.s32 %s12, 1
      %p196 = scmp.lt.s32.totalorder %s17, 1
      %s197 = scalar_select %p196, %s17, 1
      %s198 = smul.addr %s197, 2
      %s199 = smul.addr %s198, 8
      %s200 = scalar_lea.vmem %s0, %s199
      %p201 = pneg %p38
      %p202 = pneg %p35
      %p203 = pneg %p59
      %p204 = pneg %p56
      %p205 = pneg %p80
      %p206 = pneg %p77
      %p207 = pneg %p101
      %p208 = pneg %p98
      %p209 = pneg %p127
      %p210 = pneg %p124
      %p211 = scmp.lt.s32.totalorder %s17, 1
      %s212 = scalar_select %p211, %s17, 1
      %s213 = smul.addr %s212, 2
      %s214 = smul.addr %s213, 8
      %s215 = scalar_lea.vmem %s4, %s214
      %p216 = pneg %p153
      %p217 = pneg %p150
      %p218 = scmp.lt.s32.totalorder %s17, 1
      %s219 = scalar_select %p218, %s17, 1
      %s220 = smul.addr %s219, 2
      %s221 = scalar_lea.vmem %s5, %s220
      %p222 = scmp.lt.s32.totalorder %s17, 1
      %s223 = scalar_select %p222, %s17, 1
      %s224 = smul.addr %s223, 2
      %s225 = smul.addr %s224, 8
      %s226 = scalar_lea.vmem %s0, %s225
      %p227 = scmp.lt.s32.totalorder %s17, 1
      %s228 = scalar_select %p227, %s17, 1
      %s229 = smul.addr %s228, 2
      %s230 = smul.addr %s229, 8
      %s231 = scalar_lea.vmem %s4, %s230
      %p232 = scmp.lt.s32.totalorder %s17, 1
      %s233 = scalar_select %p232, %s17, 1
      %s234 = smul.addr %s233, 2
      %s235 = scalar_lea.vmem %s5, %s234
      %v236 = vld [vmem:[%s226] sm:$0xff]
      %v237 = vld [vmem:[%s226 + $0x8] sm:$0xff]
      %v238 = vld [vmem:[%s1] sm:$0x1]
      %v240 = vlaneseq
      %v241 = vshrl.u32 %v240, 7
      %v242 = vsub.s32 0, %v241
      %v243 = vrot.slane %v238, %v242
      %v245 = vmul.f32 %v236, %v243
      %v246 = vmul.f32 %v237, %v243
      %v247 = vld [vmem:[%s2] sm:$0x1]
      %v249 = vlaneseq
      %v250 = vshrl.u32 %v249, 7
      %v251 = vsub.s32 0, %v250
      %v252 = vrot.slane %v247, %v251
      %v254 = vadd.f32 %v245, %v252
      %v255 = vadd.f32 %v246, %v252
      %v256 = vmax.f32 %v254, 0.0
      %v257 = vmax.f32 %v255, 0.0
      %v258 = vld [vmem:[%s3] sm:$0xff]
      %v259 = vld [vmem:[%s3 + $0x8] sm:$0xff]
      %v260 = vld [vmem:[%s3 + $0x10] sm:$0xff]
      %v261 = vld [vmem:[%s3 + $0x18] sm:$0xff]
      %v262 = vld [vmem:[%s3 + $0x20] sm:$0xff]
      %v263 = vld [vmem:[%s3 + $0x28] sm:$0xff]
      %v264 = vld [vmem:[%s3 + $0x30] sm:$0xff]
      %v265 = vld [vmem:[%s3 + $0x38] sm:$0xff]
      %v266 = vld [vmem:[%s3 + $0x40] sm:$0xff]
      %v267 = vld [vmem:[%s3 + $0x48] sm:$0xff]
      %v268 = vld [vmem:[%s3 + $0x50] sm:$0xff]
      %v269 = vld [vmem:[%s3 + $0x58] sm:$0xff]
      %v270 = vld [vmem:[%s3 + $0x60] sm:$0xff]
      %v271 = vld [vmem:[%s3 + $0x68] sm:$0xff]
      %v272 = vld [vmem:[%s3 + $0x70] sm:$0xff]
      %v273 = vld [vmem:[%s3 + $0x78] sm:$0xff]
      %274 = vmatprep.subr.mxu0 0.0
      %275 = vmatpush1.msra.mxu0 %v273
      %276 = vmatprep.subr.mxu0 0.0
      %277 = vmatpush1.msra.mxu0 %v272
      %278 = vmatprep.subr.mxu0 0.0
      %279 = vmatpush1.msra.mxu0 %v271
      %280 = vmatprep.subr.mxu0 0.0
      %281 = vmatpush1.msra.mxu0 %v270
      %282 = vmatprep.subr.mxu0 0.0
      %283 = vmatpush1.msra.mxu0 %v269
      %284 = vmatprep.subr.mxu0 0.0
      %285 = vmatpush1.msra.mxu0 %v268
      %286 = vmatprep.subr.mxu0 0.0
      %287 = vmatpush1.msra.mxu0 %v267
      %288 = vmatprep.subr.mxu0 0.0
      %289 = vmatpush1.msra.mxu0 %v266
      %290 = vmatprep.subr.mxu0 0.0
      %291 = vmatpush1.msra.mxu0 %v265
      %292 = vmatprep.subr.mxu0 0.0
      %293 = vmatpush1.msra.mxu0 %v264
      %294 = vmatprep.subr.mxu0 0.0
      %295 = vmatpush1.msra.mxu0 %v263
      %296 = vmatprep.subr.mxu0 0.0
      %297 = vmatpush1.msra.mxu0 %v262
      %298 = vmatprep.subr.mxu0 0.0
      %299 = vmatpush1.msra.mxu0 %v261
      %300 = vmatprep.subr.mxu0 0.0
      %301 = vmatpush1.msra.mxu0 %v260
      %302 = vmatprep.subr.mxu0 0.0
      %303 = vmatpush1.msra.mxu0 %v259
      %304 = vmatprep.subr.mxu0 0.0
      %305 = vmatpush1.msra.mxu0 %v258
      %306 = vmatprep.subr.mxu0 0.0
      %307 = vmatpush2.msra.mxu0 0.0
      %308 = vmatprep.subr.mxu0 0.0
      %309 = vmatpush2.msra.mxu0 0.0
      %310 = vmatprep.subr.mxu0 0.0
      %311 = vmatpush2.msra.mxu0 0.0
      %312 = vmatprep.subr.mxu0 0.0
      %313 = vmatpush2.msra.mxu0 0.0
      %314 = vmatprep.subr.mxu0 0.0
      %315 = vmatpush2.msra.mxu0 0.0
      %316 = vmatprep.subr.mxu0 0.0
      %317 = vmatpush2.msra.mxu0 0.0
      %318 = vmatprep.subr.mxu0 0.0
      %319 = vmatpush2.msra.mxu0 0.0
      %320 = vmatprep.subr.mxu0 0.0
      %321 = vmatpush2.msra.mxu0 0.0
      %322 = vmatprep.subr.mxu0 0.0
      %323 = vmatpush2.msra.mxu0 0.0
      %324 = vmatprep.subr.mxu0 0.0
      %325 = vmatpush2.msra.mxu0 0.0
      %326 = vmatprep.subr.mxu0 0.0
      %327 = vmatpush2.msra.mxu0 0.0
      %328 = vmatprep.subr.mxu0 0.0
      %329 = vmatpush2.msra.mxu0 0.0
      %330 = vmatprep.subr.mxu0 0.0
      %331 = vmatpush2.msra.mxu0 0.0
      %332 = vmatprep.subr.mxu0 0.0
      %333 = vmatpush2.msra.mxu0 0.0
      %334 = vmatprep.subr.mxu0 0.0
      %335 = vmatpush2.msra.mxu0 0.0
      %336 = vmatprep.subr.mxu0 0.0
      %337 = vmatpush2.msra.mxu0 0.0
      %338 = vmatprep.mubr.f32.mxu0 0.0
      %339 = vmatmul.mubr.f32.gmra.mxu0 %v256
      %v340 = vpop.f32.mrf.mxu0
      %v341 = vadd.f32 0.0, %v340
      %v342 = vpop.f32.mrf.mxu0
      %343 = vmatprep.mubr.f32.mxu0 0.0
      %344 = vmatmul.mubr.f32.gmra.mxu0 %v257
      %v345 = vpop.f32.mrf.mxu0
      %v346 = vadd.f32 0.0, %v345
      %v347 = vpop.f32.mrf.mxu0
      %348 = vdwg.mxu0
      %s349 = scalar_lea.vmem %s3, 128
      %v350 = vld [vmem:[%s349] sm:$0xff]
      %v351 = vld [vmem:[%s349 + $0x8] sm:$0xff]
      %v352 = vld [vmem:[%s349 + $0x10] sm:$0xff]
      %v353 = vld [vmem:[%s349 + $0x18] sm:$0xff]
      %v354 = vld [vmem:[%s349 + $0x20] sm:$0xff]
      %v355 = vld [vmem:[%s349 + $0x28] sm:$0xff]
      %v356 = vld [vmem:[%s349 + $0x30] sm:$0xff]
      %v357 = vld [vmem:[%s349 + $0x38] sm:$0xff]
      %v358 = vld [vmem:[%s349 + $0x40] sm:$0xff]
      %v359 = vld [vmem:[%s349 + $0x48] sm:$0xff]
      %v360 = vld [vmem:[%s349 + $0x50] sm:$0xff]
      %v361 = vld [vmem:[%s349 + $0x58] sm:$0xff]
      %v362 = vld [vmem:[%s349 + $0x60] sm:$0xff]
      %v363 = vld [vmem:[%s349 + $0x68] sm:$0xff]
      %v364 = vld [vmem:[%s349 + $0x70] sm:$0xff]
      %v365 = vld [vmem:[%s349 + $0x78] sm:$0xff]
      %s366 = scalar_lea.vmem %s3, 256
      %v367 = vld [vmem:[%s366] sm:$0xff]
      %v368 = vld [vmem:[%s366 + $0x8] sm:$0xff]
      %v369 = vld [vmem:[%s366 + $0x10] sm:$0xff]
      %v370 = vld [vmem:[%s366 + $0x18] sm:$0xff]
      %v371 = vld [vmem:[%s366 + $0x20] sm:$0xff]
      %v372 = vld [vmem:[%s366 + $0x28] sm:$0xff]
      %v373 = vld [vmem:[%s366 + $0x30] sm:$0xff]
      %v374 = vld [vmem:[%s366 + $0x38] sm:$0xff]
      %v375 = vld [vmem:[%s366 + $0x40] sm:$0xff]
      %v376 = vld [vmem:[%s366 + $0x48] sm:$0xff]
      %v377 = vld [vmem:[%s366 + $0x50] sm:$0xff]
      %v378 = vld [vmem:[%s366 + $0x58] sm:$0xff]
      %v379 = vld [vmem:[%s366 + $0x60] sm:$0xff]
      %v380 = vld [vmem:[%s366 + $0x68] sm:$0xff]
      %v381 = vld [vmem:[%s366 + $0x70] sm:$0xff]
      %v382 = vld [vmem:[%s366 + $0x78] sm:$0xff]
      %383 = vmatprep.subr.mxu0 0.0
      %384 = vmatpush1.msra.mxu0 %v382
      %385 = vmatprep.subr.mxu0 0.0
      %386 = vmatpush1.msra.mxu0 %v381
      %387 = vmatprep.subr.mxu0 0.0
      %388 = vmatpush1.msra.mxu0 %v380
      %389 = vmatprep.subr.mxu0 0.0
      %390 = vmatpush1.msra.mxu0 %v379
      %391 = vmatprep.subr.mxu0 0.0
      %392 = vmatpush1.msra.mxu0 %v378
      %393 = vmatprep.subr.mxu0 0.0
      %394 = vmatpush1.msra.mxu0 %v377
      %395 = vmatprep.subr.mxu0 0.0
      %396 = vmatpush1.msra.mxu0 %v376
      %397 = vmatprep.subr.mxu0 0.0
      %398 = vmatpush1.msra.mxu0 %v375
      %399 = vmatprep.subr.mxu0 0.0
      %400 = vmatpush1.msra.mxu0 %v374
      %401 = vmatprep.subr.mxu0 0.0
      %402 = vmatpush1.msra.mxu0 %v373
      %403 = vmatprep.subr.mxu0 0.0
      %404 = vmatpush1.msra.mxu0 %v372
      %405 = vmatprep.subr.mxu0 0.0
      %406 = vmatpush1.msra.mxu0 %v371
      %407 = vmatprep.subr.mxu0 0.0
      %408 = vmatpush1.msra.mxu0 %v370
      %409 = vmatprep.subr.mxu0 0.0
      %410 = vmatpush1.msra.mxu0 %v369
      %411 = vmatprep.subr.mxu0 0.0
      %412 = vmatpush1.msra.mxu0 %v368
      %413 = vmatprep.subr.mxu0 0.0
      %414 = vmatpush1.msra.mxu0 %v367
      %415 = vmatprep.subr.mxu0 0.0
      %416 = vmatpush2.msra.mxu0 0.0
      %417 = vmatprep.subr.mxu0 0.0
      %418 = vmatpush2.msra.mxu0 0.0
      %419 = vmatprep.subr.mxu0 0.0
      %420 = vmatpush2.msra.mxu0 0.0
      %421 = vmatprep.subr.mxu0 0.0
      %422 = vmatpush2.msra.mxu0 0.0
      %423 = vmatprep.subr.mxu0 0.0
      %424 = vmatpush2.msra.mxu0 0.0
      %425 = vmatprep.subr.mxu0 0.0
      %426 = vmatpush2.msra.mxu0 0.0
      %427 = vmatprep.subr.mxu0 0.0
      %428 = vmatpush2.msra.mxu0 0.0
      %429 = vmatprep.subr.mxu0 0.0
      %430 = vmatpush2.msra.mxu0 0.0
      %431 = vmatprep.subr.mxu0 0.0
      %432 = vmatpush2.msra.mxu0 0.0
      %433 = vmatprep.subr.mxu0 0.0
      %434 = vmatpush2.msra.mxu0 0.0
      %435 = vmatprep.subr.mxu0 0.0
      %436 = vmatpush2.msra.mxu0 0.0
      %437 = vmatprep.subr.mxu0 0.0
      %438 = vmatpush2.msra.mxu0 0.0
      %439 = vmatprep.subr.mxu0 0.0
      %440 = vmatpush2.msra.mxu0 0.0
      %441 = vmatprep.subr.mxu0 0.0
      %442 = vmatpush2.msra.mxu0 0.0
      %443 = vmatprep.subr.mxu0 0.0
      %444 = vmatpush2.msra.mxu0 0.0
      %445 = vmatprep.subr.mxu0 0.0
      %446 = vmatpush2.msra.mxu0 0.0
      %447 = vmatprep.mubr.f32.mxu0 0.0
      %448 = vmatmul.mubr.f32.gmra.mxu0 %v256
      %v449 = vpop.f32.mrf.mxu0
      %v450 = vadd.f32 0.0, %v449
      %v451 = vpop.f32.mrf.mxu0
      %452 = vmatprep.mubr.f32.mxu0 0.0
      %453 = vmatmul.mubr.f32.gmra.mxu0 %v257
      %v454 = vpop.f32.mrf.mxu0
      %v455 = vadd.f32 0.0, %v454
      %v456 = vpop.f32.mrf.mxu0
      %457 = vdwg.mxu0
      %v458 = vlaneseq
      %v459 = vshrl.u32 %v458, 7
      %v460 = vadd.s32 %v459, 8
      %vm461 = vcmp.gt.s32.totalorder %v459, 0
      %vm462 = vcmp.gt.s32.totalorder %v460, 0
      %v463 = vrot.slane %v341, 7
      %v464 = vrot.slane %v346, 7
      %vm465 = vcmp.lt.s32.totalorder %v459, 1
      %v466 = vsel %vm465, %v463, %v464
      %v467 = vsel %vm465, %v464, %v463
      %v468 = vsel %vm461, %v467, 0.0
      %v469 = vsel %vm462, %v466, 0.0
      %470 = vmatprep.subr.mxu0 0.0
      %471 = vmatpush1.msra.mxu0 %v365
      %472 = vmatprep.subr.mxu0 0.0
      %473 = vmatpush1.msra.mxu0 %v364
      %474 = vmatprep.subr.mxu0 0.0
      %475 = vmatpush1.msra.mxu0 %v363
      %476 = vmatprep.subr.mxu0 0.0
      %477 = vmatpush1.msra.mxu0 %v362
      %478 = vmatprep.subr.mxu0 0.0
      %479 = vmatpush1.msra.mxu0 %v361
      %480 = vmatprep.subr.mxu0 0.0
      %481 = vmatpush1.msra.mxu0 %v360
      %482 = vmatprep.subr.mxu0 0.0
      %483 = vmatpush1.msra.mxu0 %v359
      %484 = vmatprep.subr.mxu0 0.0
      %485 = vmatpush1.msra.mxu0 %v358
      %486 = vmatprep.subr.mxu0 0.0
      %487 = vmatpush1.msra.mxu0 %v357
      %488 = vmatprep.subr.mxu0 0.0
      %489 = vmatpush1.msra.mxu0 %v356
      %490 = vmatprep.subr.mxu0 0.0
      %491 = vmatpush1.msra.mxu0 %v355
      %492 = vmatprep.subr.mxu0 0.0
      %493 = vmatpush1.msra.mxu0 %v354
      %494 = vmatprep.subr.mxu0 0.0
      %495 = vmatpush1.msra.mxu0 %v353
      %496 = vmatprep.subr.mxu0 0.0
      %497 = vmatpush1.msra.mxu0 %v352
      %498 = vmatprep.subr.mxu0 0.0
      %499 = vmatpush1.msra.mxu0 %v351
      %500 = vmatprep.subr.mxu0 0.0
      %501 = vmatpush1.msra.mxu0 %v350
      %502 = vmatprep.subr.mxu0 0.0
      %503 = vmatpush2.msra.mxu0 0.0
      %504 = vmatprep.subr.mxu0 0.0
      %505 = vmatpush2.msra.mxu0 0.0
      %506 = vmatprep.subr.mxu0 0.0
      %507 = vmatpush2.msra.mxu0 0.0
      %508 = vmatprep.subr.mxu0 0.0
      %509 = vmatpush2.msra.mxu0 0.0
      %510 = vmatprep.subr.mxu0 0.0
      %511 = vmatpush2.msra.mxu0 0.0
      %512 = vmatprep.subr.mxu0 0.0
      %513 = vmatpush2.msra.mxu0 0.0
      %514 = vmatprep.subr.mxu0 0.0
      %515 = vmatpush2.msra.mxu0 0.0
      %516 = vmatprep.subr.mxu0 0.0
      %517 = vmatpush2.msra.mxu0 0.0
      %518 = vmatprep.subr.mxu0 0.0
      %519 = vmatpush2.msra.mxu0 0.0
      %520 = vmatprep.subr.mxu0 0.0
      %521 = vmatpush2.msra.mxu0 0.0
      %522 = vmatprep.subr.mxu0 0.0
      %523 = vmatpush2.msra.mxu0 0.0
      %524 = vmatprep.subr.mxu0 0.0
      %525 = vmatpush2.msra.mxu0 0.0
      %526 = vmatprep.subr.mxu0 0.0
      %527 = vmatpush2.msra.mxu0 0.0
      %528 = vmatprep.subr.mxu0 0.0
      %529 = vmatpush2.msra.mxu0 0.0
      %530 = vmatprep.subr.mxu0 0.0
      %531 = vmatpush2.msra.mxu0 0.0
      %532 = vmatprep.subr.mxu0 0.0
      %533 = vmatpush2.msra.mxu0 0.0
      %534 = vmatprep.mubr.f32.mxu0 0.0
      %535 = vmatmul.mubr.f32.gmra.mxu0 %v256
      %v536 = vpop.f32.mrf.mxu0
      %v537 = vadd.f32 %v468, %v536
      %v538 = vpop.f32.mrf.mxu0
      %539 = vmatprep.mubr.f32.mxu0 0.0
      %540 = vmatmul.mubr.f32.gmra.mxu0 %v257
      %v541 = vpop.f32.mrf.mxu0
      %v542 = vadd.f32 %v469, %v541
      %v543 = vpop.f32.mrf.mxu0
      %544 = vdwg.mxu0
      %vm545 = vcmp.lt.s32.totalorder %v459, 15
      %vm546 = vcmp.lt.s32.totalorder %v460, 15
      %v547 = vrot.slane %v450, 1
      %v548 = vrot.slane %v455, 1
      %vm549 = vcmp.lt.s32.totalorder %v459, 7
      %v550 = vsel %vm549, %v547, %v548
      %v551 = vsel %vm549, %v548, %v547
      %v552 = vsel %vm545, %v550, 0.0
      %v553 = vsel %vm546, %v551, 0.0
      %v554 = vadd.f32 %v537, %v552
      %v555 = vadd.f32 %v542, %v553
      %556 = vst [vmem:[%s231] sm:$0xff] %v554
      %557 = vst [vmem:[%s231 + $0x8] sm:$0xff] %v555
      %v558 = vadd.f32 %v554, %v555
      %v559 = vrot.slane %v558, 4
      %v560 = vadd.f32 %v558, %v559
      %v561 = vrot.slane %v560, 2
      %v562 = vadd.f32 %v560, %v561
      %v563 = vrot.slane %v562, 1
      %v564 = vadd.f32 %v562, %v563
      %565 = vst [vmem:[%s235] sm:$0x1] %v564
      %v566 = vmul.f32 %v554, %v554
      %v567 = vmul.f32 %v555, %v555
      %v568 = vadd.f32 %v566, %v567
      %v569 = vrot.slane %v568, 4
      %v570 = vadd.f32 %v568, %v569
      %v571 = vrot.slane %v570, 2
      %v572 = vadd.f32 %v570, %v571
      %v573 = vrot.slane %v572, 1
      %v574 = vadd.f32 %v572, %v573
      %575 = vst [vmem:[%s235 + $0x1] sm:$0x1] %v574
      %p576 = scmp.lt.s32.totalorder %s17, 1
      %s577 = scalar_select %p576, %s17, 1
      %s578 = smul.addr %s577, 2
      %s579 = smul.addr %s578, 8
      %s580 = scalar_lea.vmem %s4, %s579
      %p581 = scmp.lt.s32.totalorder %s17, 1
      %s582 = scalar_select %p581, %s17, 1
      %s583 = smul.addr %s582, 2
      %s584 = scalar_lea.vmem %s5, %s583
      // Predicated region
      $region37: #{unet_block_nhwc.3} parent=35 // pred_check
        %p585 = pneg %p124
      $region38: #{unet_block_nhwc.3} parent=35 // pred_check_branch
        %587 = sbr.rel (%p585) target = $region40
      $region39: #{unet_block_nhwc.3} parent=35 // pred_region
        _
      $region40: #{unet_block_nhwc.3} parent=35 // pred_fallthru
        _
      // Predicated region
      $region41: #{unet_block_nhwc.3} parent=35 // pred_check
        %p588 = pneg %p150
      $region42: #{unet_block_nhwc.3} parent=35 // pred_check_branch
        %590 = sbr.rel (%p588) target = $region44
      $region43: #{unet_block_nhwc.3} parent=35 // pred_region
        _
      $region44: #{unet_block_nhwc.3} parent=35 // pred_fallthru
        _
    $region36: #{unet_block_nhwc.3} parent=5 // pred_fallthru
      _
    %p591 = scmp.le.s32.totalorder 2, %s12
    // Predicated region
    $region45: #{unet_block_nhwc.3} parent=5 // pred_check
      %p592 = pneg %p591
    $region46: #{unet_block_nhwc.3} parent=5 // pred_check_branch
      %594 = sbr.rel (%p592) target = $region48
    $region47: #{unet_block_nhwc.3} parent=5 // pred_region
      %s595 = ssub.s32 %s12, 2
      // Predicated region
      $region49: #{unet_block_nhwc.3} parent=47 // pred_check
        %p596 = pneg %p130
      $region50: #{unet_block_nhwc.3} parent=47 // pred_check_branch
        %598 = sbr.rel (%p596) target = $region52
      $region51: #{unet_block_nhwc.3} parent=47 // pred_region
        %p599 = scmp.lt.s32.totalorder %s18, 1
        %s600 = scalar_select %p599, %s18, 1
        %s601 = smul.addr %s600, 2
        %s602 = smul.addr %s601, 8
        %s603 = scalar_lea.vmem %s4, %s602
      $region52: #{unet_block_nhwc.3} parent=47 // pred_fallthru
        _
      // Predicated region
      $region53: #{unet_block_nhwc.3} parent=47 // pred_check
        %p604 = pneg %p156
      $region54: #{unet_block_nhwc.3} parent=47 // pred_check_branch
        %606 = sbr.rel (%p604) target = $region56
      $region55: #{unet_block_nhwc.3} parent=47 // pred_region
        %p607 = scmp.lt.s32.totalorder %s18, 1
        %s608 = scalar_select %p607, %s18, 1
        %s609 = smul.addr %s608, 2
        %s610 = scalar_lea.vmem %s5, %s609
      $region56: #{unet_block_nhwc.3} parent=47 // pred_fallthru
        _
    $region48: #{unet_block_nhwc.3} parent=5 // pred_fallthru
      _
  $region6: #{unet_block_nhwc.3} parent=0 // loop_footer
    %s16 = sadd.s32 1, %s12
  $region7: #{unet_block_nhwc.3} parent=0 // loop_footer_branch
    %11 = sbr.rel target = $region3
  $region8: #{unet_block_nhwc.3} parent=0 // loop_exit
    _

</llo_original>
